<compile_context>
chip_gen: v7x
topology: tpu7x:2x2x1
jax: 0.10.0
libtpu: 0.0.40
codegen_flags: <defaults>
</compile_context>

<pallas_src>
import functools

import jax
import jax.numpy as jnp
from jax.experimental import pallas as pl
from jax.experimental.pallas import tpu as pltpu

BN_EPS = 1e-5


def _round_up(x, m):
    return (x + m - 1) // m * m


def _tile_bytes(shape, itemsize):
    """VMEM bytes of a tile AFTER lane (128) and sublane (8/16/32) padding."""
    shape = tuple(int(d) for d in shape)
    minor = _round_up(shape[-1], 128)
    pack = 8 * (4 // itemsize)          # f32 -> 8 rows/vreg, bf16 -> 16
    second = _round_up(shape[-2], pack) if len(shape) >= 2 else 1
    lead = 1
    for d in shape[:-2]:
        lead *= d
    return lead * second * minor * itemsize


def _vmem_capacity_bytes():
    try:
        return int(pltpu.get_tpu_info().vmem_capacity_bytes)
    except Exception:
        return 64 << 20                 # conservative fallback (v7x-sized)


def _pick_sub_p(tile_p, b_pad, cf_pad, budget_bytes=4 << 20):
    """Spatial sub-chunk (multiple of 128, divides tile_p) bounding the f32 feats
    intermediate (b_pad, sub_p, cf_pad)."""
    candidates = [s for s in range(128, tile_p + 1, 128) if tile_p % s == 0]
    if not candidates:
        return tile_p
    fitting = [s for s in candidates
               if _tile_bytes((b_pad, s, cf_pad), 4) <= budget_bytes]
    return max(fitting) if fitting else min(candidates)


def _pick_tile_p(p_total, b_pad, cin_pad, cf_pad, x_itemsize, budget_bytes):
    """Largest legal spatial tile (divides P, multiple of 128 or == P) whose
    per-step live footprint fits the budget (lane/sublane-padded accounting)."""
    candidates = [d for d in range(1, p_total + 1)
                  if p_total % d == 0 and (d % 128 == 0 or d == p_total)]

    def step_bytes(t):
        sub = _pick_sub_p(t, b_pad, cf_pad)
        return (2 * _tile_bytes((b_pad, cin_pad, t), x_itemsize)   # x, 2 buffers
                + _tile_bytes((b_pad, sub, cf_pad), 4)             # f32 feats
                + _tile_bytes((b_pad, sub, cin_pad), x_itemsize))  # transposed xt

    fitting = [d for d in candidates if step_bytes(d) <= budget_bytes]
    return max(fitting) if fitting else min(candidates)


def encoder_stream_kernel(x_ref, wconv_ref, bconv_ref, psum_ref, *, sub_p, n_sub):
    """Streaming backbone stand-in: per spatial sub-chunk, 1x1 conv (bf16 MXU,
    f32 accumulate) + bias + ReLU, accumulate the spatial SUM into the resident
    (1, B_pad, Cf_pad) partial-sum output block."""
    p_idx = pl.program_id(1)

    @pl.when(p_idx == 0)
    def _init():
        psum_ref[...] = jnp.zeros_like(psum_ref)

    wconv = wconv_ref[...]                 # (Cin_pad, Cf_pad) bf16, resident
    bconv = bconv_ref[...]                 # (1, Cf_pad) f32

    @pl.loop(0, n_sub)
    def _sub(j):
        start = pl.multiple_of(j * sub_p, sub_p)
        xt = x_ref[:, :, pl.ds(start, sub_p)]        # (B_pad, Cin_pad, sub_p) bf16
        xt = jnp.swapaxes(xt, 1, 2)                  # (B_pad, sub_p, Cin_pad)
        feats = jax.lax.dot_general(
            xt, wconv,
            dimension_numbers=(((2,), (0,)), ((), ())),
            preferred_element_type=jnp.float32)      # (B_pad, sub_p, Cf_pad) f32
        feats = jnp.maximum(feats + bconv, 0.0)      # bias + ReLU
        psum_ref[0, :, :] += jnp.sum(feats, axis=1)  # running spatial sum


def encoder_head_kernel(psum_ref, wemb_ref, bemb_ref, gamma_ref, beta_ref, out_ref,
                        *, n_valid_rows, inv_p):
    """Once-only epilogue: combine partial sums -> AdaptiveAvgPool2d((1,1)) ->
    Linear(embed) -> BatchNorm1d (training-mode batch stats, masked to real rows)."""
    pooled = jnp.sum(psum_ref[...], axis=0) * inv_p          # (B_pad, Cf_pad) f32
    emb = jnp.dot(pooled.astype(jnp.bfloat16), wemb_ref[...],
                  preferred_element_type=jnp.float32) + bemb_ref[...]
    row = jax.lax.broadcasted_iota(jnp.int32, emb.shape, 0)
    mask = (row < n_valid_rows).astype(jnp.float32)
    inv_n = 1.0 / n_valid_rows
    mu = jnp.sum(emb * mask, axis=0, keepdims=True) * inv_n
    centered = (emb - mu) * mask
    var = jnp.sum(centered * centered, axis=0, keepdims=True) * inv_n
    y = (emb - mu) * jax.lax.rsqrt(var + BN_EPS)
    out_ref[...] = (y * gamma_ref[...] + beta_ref[...]).astype(out_ref.dtype)


def encoder_cnn_forward(images_nchw, params, *, tile_p=None, sub_p=None):
    """images_nchw: (B, Cin, H, W) float32.  Returns (B, embed_size) float32."""
    B, Cin, H, W = images_nchw.shape
    P = H * W
    Cfeat = params["wconv"].shape[-1]
    E = params["bemb"].shape[-1]

    B_pad = _round_up(B, 8)
    Cin_pad = _round_up(Cin, 8)
    Cf_pad = _round_up(Cfeat, 128)
    E_pad = _round_up(E, 128)

    # NCHW -> (B, Cin, P): spatial on the lane axis, NO transpose needed.
    x = images_nchw.reshape(B, Cin, P)
    x = jnp.pad(x, ((0, B_pad - B), (0, Cin_pad - Cin), (0, 0))).astype(jnp.bfloat16)

    wconv = jnp.pad(params["wconv"],
                    ((0, Cin_pad - Cin), (0, Cf_pad - Cfeat))).astype(jnp.bfloat16)
    bconv = jnp.pad(params["bconv"], ((0, 0), (0, Cf_pad - Cfeat))).astype(jnp.float32)
    wemb = jnp.pad(params["wemb"],
                   ((0, Cf_pad - Cfeat), (0, E_pad - E))).astype(jnp.bfloat16)
    bemb = jnp.pad(params["bemb"], ((0, 0), (0, E_pad - E))).astype(jnp.float32)
    gamma = jnp.pad(params["gamma"], ((0, 0), (0, E_pad - E))).astype(jnp.float32)
    beta = jnp.pad(params["beta"], ((0, 0), (0, E_pad - E))).astype(jnp.float32)

    # Per-generation VMEM budgets (128 MiB parts get bigger tiles; v7x stays tight).
    cap = _vmem_capacity_bytes()
    if cap >= (100 << 20):
        step_budget, limit_cap = 28 << 20, 100 << 20     # v5e / v6e
    else:
        step_budget, limit_cap = 12 << 20, 48 << 20      # v7x / unknown

    if tile_p is None:
        tile_p = _pick_tile_p(P, B_pad, Cin_pad, Cf_pad, 2, step_budget)
    assert P % tile_p == 0, "spatial tile must divide H*W (keeps avg-pool exact)"
    assert tile_p % 128 == 0 or tile_p == P, "spatial tile must be lane-aligned (x128)"
    n_tiles = P // tile_p

    if sub_p is None:
        sub_p = _pick_sub_p(tile_p, B_pad, Cf_pad)
    assert tile_p % sub_p == 0, "sub-chunk must divide the spatial tile"
    assert sub_p % 128 == 0 or sub_p == tile_p, "sub-chunk must be lane-aligned (x128)"
    n_sub = tile_p // sub_p

    # Two partial-sum streams -> a "parallel" leading axis (uses both TCs on v7x;
    # harmless on single-TC v5e/v6e).
    n_split = 2 if (n_tiles >= 2 and n_tiles % 2 == 0) else 1
    tiles_per_split = n_tiles // n_split

    est = (2 * _tile_bytes((B_pad, Cin_pad, tile_p), 2)      # x tile, 2 buffers
           + 2 * _tile_bytes((Cin_pad, Cf_pad), 2)           # wconv buffers
           + 2 * _tile_bytes((1, Cf_pad), 4)                 # bconv
           + 2 * _tile_bytes((1, B_pad, Cf_pad), 4)          # resident psum block
           + _tile_bytes((B_pad, sub_p, Cf_pad), 4)          # f32 feats intermediate
           + _tile_bytes((B_pad, sub_p, Cin_pad), 2))        # transposed xt (vregs)
    vmem_limit = int(min(max(2 * est + (4 << 20), 8 << 20), limit_cap))

    stream_kernel = functools.partial(encoder_stream_kernel, sub_p=sub_p, n_sub=n_sub)

    psum = pl.pallas_call(
        stream_kernel,
        out_shape=jax.ShapeDtypeStruct((n_split, B_pad, Cf_pad), jnp.float32),
        grid_spec=pltpu.PrefetchScalarGridSpec(
            num_scalar_prefetch=0,
            grid=(n_split, tiles_per_split),
            in_specs=[
                pl.BlockSpec((B_pad, Cin_pad, tile_p),
                             lambda s, p: (0, 0, s * tiles_per_split + p)),  # x
                pl.BlockSpec((Cin_pad, Cf_pad), lambda s, p: (0, 0)),        # wconv
                pl.BlockSpec((1, Cf_pad), lambda s, p: (0, 0)),              # bconv
            ],
            out_specs=pl.BlockSpec((1, B_pad, Cf_pad), lambda s, p: (s, 0, 0)),
        ),
        compiler_params=pltpu.CompilerParams(
            dimension_semantics=("parallel", "arbitrary"),
            vmem_limit_bytes=vmem_limit,
        ),
    )(x, wconv, bconv)

    # Tiny once-only epilogue in its own pallas_call (keeps wemb & friends out of
    # the streaming kernel's VMEM).
    head_kernel = functools.partial(encoder_head_kernel,
                                    n_valid_rows=B, inv_p=1.0 / float(P))
    est_head = (2 * _tile_bytes((n_split, B_pad, Cf_pad), 4)
                + 2 * _tile_bytes((Cf_pad, E_pad), 2)
                + 6 * _tile_bytes((1, E_pad), 4)
                + 2 * _tile_bytes((B_pad, E_pad), 4)
                + _tile_bytes((B_pad, Cf_pad), 4))
    vmem_limit_head = int(min(max(2 * est_head + (2 << 20), 8 << 20), limit_cap))

    out = pl.pallas_call(
        head_kernel,
        out_shape=jax.ShapeDtypeStruct((B_pad, E_pad), jnp.float32),
        grid_spec=pltpu.PrefetchScalarGridSpec(
            num_scalar_prefetch=0,
            grid=(1,),
            in_specs=[
                pl.BlockSpec((n_split, B_pad, Cf_pad), lambda i: (0, 0, 0)),
                pl.BlockSpec((Cf_pad, E_pad), lambda i: (0, 0)),
                pl.BlockSpec((1, E_pad), lambda i: (0, 0)),
                pl.BlockSpec((1, E_pad), lambda i: (0, 0)),
                pl.BlockSpec((1, E_pad), lambda i: (0, 0)),
            ],
            out_specs=pl.BlockSpec((B_pad, E_pad), lambda i: (0, 0)),
        ),
        compiler_params=pltpu.CompilerParams(
            dimension_semantics=("arbitrary",),
            vmem_limit_bytes=vmem_limit_head,
        ),
    )(psum, wemb, bemb, gamma, beta)

    return out[:B, :E]


def init_params(key, cin, cfeat, embed_size):
    k1, k2, k3, k4 = jax.random.split(key, 4)
    return {
        # backbone stand-in (1x1 conv): (Cin, Cfeat) weight, (1, Cfeat) bias
        "wconv": jax.random.normal(k1, (cin, cfeat), jnp.float32) * 0.1,
        "bconv": jax.random.normal(k2, (1, cfeat), jnp.float32) * 0.1,
        # self.embed = nn.Linear(resnet.fc.in_features, embed_size)
        "wemb": jax.random.normal(k3, (cfeat, embed_size), jnp.float32) * 0.05,
        "bemb": jax.random.normal(k4, (1, embed_size), jnp.float32) * 0.05,
        # self.batch_norm = nn.BatchNorm1d(embed_size): weight=1, bias=0 at init
        "gamma": jnp.ones((1, embed_size), jnp.float32),
        "beta": jnp.zeros((1, embed_size), jnp.float32),
    }


def reference_forward(images_nchw, params):
    """Pure-JAX reference with the same bf16-matmul / f32-accumulate math."""
    B, Cin, H, W = images_nchw.shape
    x = images_nchw.reshape(B, Cin, H * W)
    feats = jnp.einsum("bcp,cf->bpf",
                       x.astype(jnp.bfloat16), params["wconv"].astype(jnp.bfloat16),
                       preferred_element_type=jnp.float32)
    feats = jnp.maximum(feats + params["bconv"], 0.0)
    pooled = jnp.mean(feats, axis=1)
    emb = jnp.dot(pooled.astype(jnp.bfloat16), params["wemb"].astype(jnp.bfloat16),
                  preferred_element_type=jnp.float32) + params["bemb"]
    mu = jnp.mean(emb, axis=0, keepdims=True)
    var = jnp.mean((emb - mu) ** 2, axis=0, keepdims=True)
    return (emb - mu) * jax.lax.rsqrt(var + BN_EPS) * params["gamma"] + params["beta"]


if __name__ == "__main__":
    # Small synthetic shapes (real module uses Cin=3, 224x224, Cfeat=2048).
    B, Cin, H, W = 2, 4, 16, 16
    CFEAT = 256          # stands in for resnet.fc.in_features
    EMBED_SIZE = 32

    key = jax.random.PRNGKey(0)
    k_img, k_par = jax.random.split(key)
    images = jax.random.normal(k_img, (B, Cin, H, W), jnp.float32)
    params = init_params(k_par, Cin, CFEAT, EMBED_SIZE)

    ref = jax.block_until_ready(reference_forward(images, params))

    # Three paths: 2-tile / 2-way split (exercises parallel axis + accumulator),
    # single-tile with multi-sub-chunk inner loop, and fully auto-sized.
    out_split = jax.block_until_ready(encoder_cnn_forward(images, params, tile_p=128))
    out_sub = jax.block_until_ready(
        encoder_cnn_forward(images, params, tile_p=256, sub_p=128))
    out_auto = jax.block_until_ready(encoder_cnn_forward(images, params))

    for name, out in (("split", out_split), ("sub", out_sub), ("auto", out_auto)):
        assert out.shape == (B, EMBED_SIZE), name
        assert jnp.allclose(out, ref, atol=2e-2, rtol=2e-2), f"{name} kernel mismatch"
    print("KERNEL_OK")
</pallas_src>

<mosaic_0001>
module attributes {stable_mosaic.version = 11 : i64} {
  func.func @encoder_stream_kernel(%arg0: i32, %arg1: i32, %arg2: memref<8x8x128xbf16, #tpu.memory_space<vmem>>, %arg3: memref<8x256xbf16, #tpu.memory_space<vmem>>, %arg4: memref<1x256xf32, #tpu.memory_space<vmem>>, %arg5: memref<1x8x256xf32, #tpu.memory_space<vmem>>) attributes {dimension_semantics = [#tpu.dimension_semantics<parallel>, #tpu.dimension_semantics<arbitrary>], iteration_bounds = array<i64: 2, 1>, scalar_prefetch = 0 : i64, scratch_operands = 0 : i64, tpu.core_type = #tpu.core_type<tc>, window_params = [{transform_indices = @transform_0, window_bounds = array<i64: 8, 8, 128>}, {pipeline_mode = #tpu.pipeline_mode<synchronous>, transform_indices = @transform_1, window_bounds = array<i64: 8, 256>}, {pipeline_mode = #tpu.pipeline_mode<synchronous>, transform_indices = @transform_2, window_bounds = array<i64: 1, 256>}, {transform_indices = @transform_3, window_bounds = array<i64: 1, 8, 256>}]} {
    %c0_i32 = arith.constant 0 : i32
    %0 = arith.cmpi eq, %arg1, %c0_i32 : i32
    %1 = arith.extui %0 : i1 to i32
    %c0_i32_0 = arith.constant 0 : i32
    %2 = arith.cmpi ne, %1, %c0_i32_0 : i32
    scf.if %2 {
      %cst_17 = arith.constant 0.000000e+00 : f32
      %25 = vector.broadcast %cst_17 : f32 to vector<1x8x256xf32>
      %c0_18 = arith.constant 0 : index
      %c0_19 = arith.constant 0 : index
      %c0_20 = arith.constant 0 : index
      %26 = vector.load %arg5[%c0_18, %c0_19, %c0_20] : memref<1x8x256xf32, #tpu.memory_space<vmem>>, vector<1x8x256xf32>
      tpu.vector_store %arg5[%c0_18, %c0_19, %c0_20], %25 {strides = array<i32>} : memref<1x8x256xf32, #tpu.memory_space<vmem>>, vector<1x8x256xf32>,
    } else {
    }
    %c0 = arith.constant 0 : index
    %c0_1 = arith.constant 0 : index
    %3 = vector.load %arg3[%c0, %c0_1] : memref<8x256xbf16, #tpu.memory_space<vmem>>, vector<8x256xbf16>
    %c0_2 = arith.constant 0 : index
    %c0_3 = arith.constant 0 : index
    %4 = vector.load %arg4[%c0_2, %c0_3] : memref<1x256xf32, #tpu.memory_space<vmem>>, vector<1x256xf32>
    %c0_i32_4 = arith.constant 0 : i32
    %c1_i32 = arith.constant 1 : i32
    %5 = arith.muli %c0_i32_4, %c1_i32 : i32
    %c0_i32_5 = arith.constant 0 : i32
    %6 = arith.addi %c0_i32_5, %5 : i32
    %c128_i32 = arith.constant 128 : i32
    %7 = arith.muli %6, %c128_i32 : i32
    %8 = tpu.assume_multiple %7, 128 : i32
    %c0_6 = arith.constant 0 : index
    %c0_7 = arith.constant 0 : index
    %9 = arith.index_cast %8 : i32 to index
    %10 = vector.load %arg2[%c0_6, %c0_7, %9] : memref<8x8x128xbf16, #tpu.memory_space<vmem>>, vector<8x8x128xbf16>
    %11 = tpu.transpose %10, [0, 2, 1] : vector<8x8x128xbf16> -> vector<8x128x8xbf16>
    %cst = arith.constant dense<0.000000e+00> : vector<8x128x256xf32>
    %12 = tpu.matmul %11, %3, %cst {dimension_numbers = #tpu.dot_dimension_numbers<[2], [0], [0, 1], [1], [0, 0, 0, 1, 1, 1], [], []>} : vector<8x128x8xbf16>, vector<8x256xbf16>, vector<8x128x256xf32> -> vector<8x128x256xf32>
    %13 = vector.shape_cast %4 : vector<1x256xf32> to vector<1x1x256xf32>
    %14 = vector.broadcast %13 : vector<1x1x256xf32> to vector<8x128x256xf32>
    %15 = arith.addf %12, %14 : vector<8x128x256xf32>
    %cst_8 = arith.constant 0.000000e+00 : f32
    %16 = vector.broadcast %cst_8 : f32 to vector<8x128x256xf32>
    %17 = arith.maximumf %15, %16 : vector<8x128x256xf32>
    %c0_9 = arith.constant 0 : index
    %c0_10 = arith.constant 0 : index
    %c0_11 = arith.constant 0 : index
    %18 = vector.load %arg5[%c0_9, %c0_10, %c0_11] : memref<1x8x256xf32, #tpu.memory_space<vmem>>, vector<1x8x256xf32>
    %19 = vector.shape_cast %18 : vector<1x8x256xf32> to vector<8x256xf32>
    %cst_12 = arith.constant dense<0.000000e+00> : vector<8x256xf32>
    %20 = vector.multi_reduction <add>, %17, %cst_12 [1] : vector<8x128x256xf32> to vector<8x256xf32>
    %21 = arith.addf %19, %20 : vector<8x256xf32>
    %c0_13 = arith.constant 0 : index
    %c0_14 = arith.constant 0 : index
    %c0_15 = arith.constant 0 : index
    %22 = vector.load %arg5[%c0_13, %c0_14, %c0_15] : memref<1x8x256xf32, #tpu.memory_space<vmem>>, vector<1x8x256xf32>
    %23 = vector.shape_cast %22 : vector<1x8x256xf32> to vector<8x256xf32>
    %24 = vector.shape_cast %21 : vector<8x256xf32> to vector<1x8x256xf32>
    tpu.vector_store %arg5[%c0_13, %c0_14, %c0_15], %24 {strides = array<i32>} : memref<1x8x256xf32, #tpu.memory_space<vmem>>, vector<1x8x256xf32>,
    %c1_i32_16 = arith.constant 1 : i32
    return
  }
  func.func @transform_0(%arg0: i32, %arg1: i32) -> (i32, i32, i32) {
    %c1_i32 = arith.constant 1 : i32
    %0 = arith.muli %arg0, %c1_i32 : i32
    %1 = arith.addi %0, %arg1 : i32
    %c0_i32 = arith.constant 0 : i32
    %c0_i32_0 = arith.constant 0 : i32
    %c0_i32_1 = arith.constant 0 : i32
    return %c0_i32, %c0_i32_0, %1 : i32, i32, i32
  }
  func.func @transform_1(%arg0: i32, %arg1: i32) -> (i32, i32) {
    %c0_i32 = arith.constant 0 : i32
    %c0_i32_0 = arith.constant 0 : i32
    %c0_i32_1 = arith.constant 0 : i32
    return %c0_i32, %c0_i32_0 : i32, i32
  }
  func.func @transform_2(%arg0: i32, %arg1: i32) -> (i32, i32) {
    %c0_i32 = arith.constant 0 : i32
    %c0_i32_0 = arith.constant 0 : i32
    %c0_i32_1 = arith.constant 0 : i32
    return %c0_i32, %c0_i32_0 : i32, i32
  }
  func.func @transform_3(%arg0: i32, %arg1: i32) -> (i32, i32, i32) {
    %c0_i32 = arith.constant 0 : i32
    %c0_i32_0 = arith.constant 0 : i32
    %c0_i32_1 = arith.constant 0 : i32
    return %arg0, %c0_i32, %c0_i32_0 : i32, i32, i32
  }
}

</mosaic_0001>

<llo_original>
// kernel: tpu_custom_call.1
$region0: #{tpu_custom_call.1}
  #allocation0 [shape = 'u32[]', space=smem, size = 0x4, offset = 0x4, fixed_abs, tag = 'smem constant byte address 0x4 - core index']
  #allocation1 [shape = 'u32[144,128]{1,0:T(1,128)}', space=vmem, size = 0x12000, scoped, tag = 'internal scratch']
  %s0 = inlined_call_operand.hbm [shape: bf16[8,8,256], index: 0, kind: input, shape index: {}]
  %s1 = inlined_call_operand.hbm [shape: bf16[8,256], index: 1, kind: input, shape index: {}]
  %s2 = inlined_call_operand.vmem [shape: f32[1,256], index: 2, kind: input, shape index: {}]
  %s3 = inlined_call_operand.hbm [shape: f32[2,8,256], index: 3, kind: output, shape index: {}]
  %s4 = sld [smem:[#allocation0]]
  $region57: #{tpu_custom_call.1} parent=0
    _
  %s6 = ssub.s32 1, %s4
  %s7 = scalar_select 0, %s6, %s4
  $region1: #{tpu_custom_call.1} parent=0
    #allocation2 [shape = 'u8[32768]{0}', space=vmem, size = 0x8000, scoped, tag = 'input window, operand 0']
    #allocation3 [shape = 's32[2]{0}', space=sflag, size = 0x8, scoped, tag = 'scoped memory for tpu_custom_call.1']
    #allocation4 [shape = 's32[2]{0}', space=sflag, size = 0x8, scoped, tag = 'scoped memory for tpu_custom_call.1']
    #allocation5 [shape = 'u8[4096]{0}', space=vmem, size = 0x1000, scoped, tag = 'input window, operand 1, single buffered']
    #allocation6 [shape = 's32[1]{0}', space=sflag, size = 0x4, scoped, tag = 'scoped memory for tpu_custom_call.1']
    #allocation7 [shape = 'u8[16384]{0}', space=vmem, size = 0x4000, scoped, tag = 'output window, operand 0']
    %8 = vsyncpa [#allocation3], 0
    %s9 = scalar_lea.sflag [#allocation3], 1
    %10 = vsyncpa %s9, 0
    %11 = vsyncpa [#allocation6], 0
    %12 = vsyncpa [#allocation4], 0
    %s13 = scalar_lea.sflag [#allocation4], 1
    %14 = vsyncpa %s13, 0
    loop: start=0, step=1, limit=4
    $region2: #{tpu_custom_call.1} parent=1 // loop_pre_header
      _
    $region3: #{tpu_custom_call.1} parent=1 // loop_header
      %s16 = sphi 0, %s20
      %p17 = scmp.ge.s32.totalorder %s16, 4
      %s23 = sphi 0, %s35
      %s24 = sphi 0, %s31
      %s25 = sphi 0, %s23
      %s26 = sphi 0, %s24
      %s27 = sphi 0, %s25
      %s28 = sphi 0, %s26
      %s40 = sphi 0, %s42
      %s43 = sphi 0, %s40
      %s44 = sphi 0, %s43
      %s60 = sphi 0, %s44
      %s64 = sphi 0, %s64
      %s66 = sphi 0, %s64
      %s67 = sphi 0, %s66
      %s81 = sphi 0, %s67
      %s85 = sphi 0, %s85
      %s87 = sphi 0, %s85
      %s88 = sphi 0, %s87
      %s102 = sphi 0, %s88
      %s108 = sphi 0, %s110
      %s111 = sphi 0, %s108
      %s112 = sphi 0, %s111
      %s128 = sphi 0, %s112
    $region4: #{tpu_custom_call.1} parent=1 // loop_header_branch
      %19 = sbr.rel (%p17) target = $region8
    $region5: #{tpu_custom_call.1} parent=1 // loop_body
      %s21 = ssub.s32 %s16, 1
      %s22 = ssub.s32 %s16, 2
      %s29 = sadd.s32 1, %s24
      %p30 = scmp.ge.s32.totalorder %s29, 1
      %s31 = scalar_select %p30, 0, %s29
      %s32 = sadd.s32 1, %s23
      %s33 = scalar_select %p30, %s32, %s23
      %p34 = scmp.ge.s32.totalorder %s33, 2
      %s35 = scalar_select %p34, 0, %s33
      %s36 = sadd.s32 %s23, %s24
      %s37 = sadd.s32 %s35, %s31
      %s38 = ssub.s32 %s36, %s37
      %p39 = scmp.eq.s32.totalorder %s38, 0
      %s41 = sadd.s32 %s40, 1
      %s42 = scalar_select %p39, %s40, %s41
      %p45 = pneg %p39
      %p46 = scmp.eq.s32.totalorder %s16, 1
      %p47 = por %p45, %p46
      %p48 = scmp.ne.s32.totalorder %s40, %s43
      %p49 = scmp.eq.s32.totalorder %s16, 0
      %p50 = por %p48, %p49
      %p51 = scmp.ne.s32.totalorder %s40, %s43
      %p52 = scmp.eq.s32.totalorder %s21, 1
      %p53 = por %p51, %p52
      %p54 = scmp.ne.s32.totalorder %s43, %s44
      %p55 = scmp.eq.s32.totalorder %s21, 0
      %p56 = por %p54, %p55
      %p57 = scmp.ne.s32.totalorder %s43, %s44
      %p58 = scmp.eq.s32.totalorder %s22, 1
      %p59 = por %p57, %p58
      %p61 = scmp.ne.s32.totalorder %s44, %s60
      %p62 = scmp.eq.s32.totalorder %s22, 0
      %p63 = por %p61, %p62
      %s65 = sadd.s32 %s64, 1
      %p68 = scmp.eq.s32.totalorder %s16, 1
      %p69 = scmp.ne.s32.totalorder %s64, %s66
      %p70 = scmp.eq.s32.totalorder %s16, 0
      %p71 = por %p69, %p70
      %p72 = scmp.ne.s32.totalorder %s64, %s66
      %p73 = scmp.eq.s32.totalorder %s21, 1
      %p74 = por %p72, %p73
      %p75 = scmp.ne.s32.totalorder %s66, %s67
      %p76 = scmp.eq.s32.totalorder %s21, 0
      %p77 = por %p75, %p76
      %p78 = scmp.ne.s32.totalorder %s66, %s67
      %p79 = scmp.eq.s32.totalorder %s22, 1
      %p80 = por %p78, %p79
      %p82 = scmp.ne.s32.totalorder %s67, %s81
      %p83 = scmp.eq.s32.totalorder %s22, 0
      %p84 = por %p82, %p83
      %s86 = sadd.s32 %s85, 1
      %p89 = scmp.eq.s32.totalorder %s16, 1
      %p90 = scmp.ne.s32.totalorder %s85, %s87
      %p91 = scmp.eq.s32.totalorder %s16, 0
      %p92 = por %p90, %p91
      %p93 = scmp.ne.s32.totalorder %s85, %s87
      %p94 = scmp.eq.s32.totalorder %s21, 1
      %p95 = por %p93, %p94
      %p96 = scmp.ne.s32.totalorder %s87, %s88
      %p97 = scmp.eq.s32.totalorder %s21, 0
      %p98 = por %p96, %p97
      %p99 = scmp.ne.s32.totalorder %s87, %s88
      %p100 = scmp.eq.s32.totalorder %s22, 1
      %p101 = por %p99, %p100
      %p103 = scmp.ne.s32.totalorder %s88, %s102
      %p104 = scmp.eq.s32.totalorder %s22, 0
      %p105 = por %p103, %p104
      %s106 = ssub.s32 %s23, %s35
      %p107 = scmp.eq.s32.totalorder %s106, 0
      %s109 = sadd.s32 %s108, 1
      %s110 = scalar_select %p107, %s108, %s109
      %p113 = pneg %p107
      %p114 = scmp.eq.s32.totalorder %s16, 1
      %p115 = por %p113, %p114
      %p116 = scmp.ne.s32.totalorder %s108, %s111
      %p117 = scmp.eq.s32.totalorder %s16, 0
      %p118 = por %p116, %p117
      %p119 = scmp.ne.s32.totalorder %s108, %s111
      %p120 = scmp.eq.s32.totalorder %s21, 1
      %p121 = por %p119, %p120
      %p122 = scmp.ne.s32.totalorder %s111, %s112
      %p123 = scmp.eq.s32.totalorder %s21, 0
      %p124 = por %p122, %p123
      %p125 = scmp.ne.s32.totalorder %s111, %s112
      %p126 = scmp.eq.s32.totalorder %s22, 1
      %p127 = por %p125, %p126
      %p129 = scmp.ne.s32.totalorder %s112, %s128
      %p130 = scmp.eq.s32.totalorder %s22, 0
      %p131 = por %p129, %p130
      %p132 = scmp.le.s32.totalorder 1, %s16
      %p133 = scmp.lt.s32.totalorder %s16, 3
      %p134 = pnand %p132, %p133
      %p135 = pneg %p134
      // Predicated region
      $region9: #{tpu_custom_call.1} parent=5 // pred_check
        _
      $region10: #{tpu_custom_call.1} parent=5 // pred_check_branch
        %137 = sbr.rel (%p134) target = $region12
      $region11: #{tpu_custom_call.1} parent=5 // pred_region
        %s138 = ssub.s32 %s16, 1
        // Predicated region
        $region13: #{tpu_custom_call.1} parent=11 // pred_check
          %p139 = pneg %p77
        $region14: #{tpu_custom_call.1} parent=11 // pred_check_branch
          %141 = sbr.rel (%p139) target = $region16
        $region15: #{tpu_custom_call.1} parent=11 // pred_region
          %s143 = ssub.s32 128, 128
          %144 = vsyncadd [#allocation6], %s143
          %s146 = sshll.u32 [#allocation5], 4
          %s147 = int_to_ptr.vmem [resolvable:$true] %s146
          %149 = dma.hbm_to_vmem [thread:$0]  %s1, 128, %s147, [#allocation6]
        $region16: #{tpu_custom_call.1} parent=11 // pred_fallthru
          _
        // Predicated region
        $region17: #{tpu_custom_call.1} parent=11 // pred_check
          %p150 = pneg %p98
        $region18: #{tpu_custom_call.1} parent=11 // pred_check_branch
          %152 = sbr.rel (%p150) target = $region20
        $region19: #{tpu_custom_call.1} parent=11 // pred_region
          _
        $region20: #{tpu_custom_call.1} parent=11 // pred_fallthru
          _
      $region12: #{tpu_custom_call.1} parent=5 // pred_fallthru
        _
      %p153 = scmp.lt.s32.totalorder %s16, 2
      // Predicated region
      $region21: #{tpu_custom_call.1} parent=5 // pred_check
        %p154 = pneg %p153
      $region22: #{tpu_custom_call.1} parent=5 // pred_check_branch
        %156 = sbr.rel (%p154) target = $region24
      $region23: #{tpu_custom_call.1} parent=5 // pred_region
        // Predicated region
        $region25: #{tpu_custom_call.1} parent=23 // pred_check
          %p157 = pneg %p50
        $region26: #{tpu_custom_call.1} parent=23 // pred_check_branch
          %159 = sbr.rel (%p157) target = $region28
        $region27: #{tpu_custom_call.1} parent=23 // pred_region
          %s160 = sand.u32 %s40, 1
          %s161 = scalar_lea.sflag [#allocation3], %s160
          %s162 = sand.u32 %s40, 1
          %s163 = smul.addr %s162, 32
          %s164 = scalar_lea.vmem [#allocation2], %s163
          %s165 = sadd.s32 %s23, %s24
          %s167 = ssub.s32 512, 512
          %168 = vsyncadd %s161, %s167
          %s169 = smul.addr %s165, 64
          %s170 = scalar_lea.hbm %s0, %s169
          %s171 = sshll.u32 %s164, 4
          %s172 = int_to_ptr.vmem [resolvable:$true] %s171
          %177 = dma.hbm_to_vmem [thread:$0]  %s170, 512, %s172, %s161, 128, 64, 4
        $region28: #{tpu_custom_call.1} parent=23 // pred_fallthru
          _
      $region24: #{tpu_custom_call.1} parent=5 // pred_fallthru
        _
      %p178 = scmp.le.s32.totalorder 1, %s16
      %p179 = scmp.lt.s32.totalorder %s16, 3
      %p180 = pnand %p178, %p179
      %p181 = pneg %p180
      // Predicated region
      $region29: #{tpu_custom_call.1} parent=5 // pred_check
        _
      $region30: #{tpu_custom_call.1} parent=5 // pred_check_branch
        %183 = sbr.rel (%p180) target = $region32
      $region31: #{tpu_custom_call.1} parent=5 // pred_region
        %s184 = ssub.s32 %s16, 1
        %s185 = sand.u32 %s43, 1
        %s186 = scalar_lea.sflag [#allocation3], %s185
        %s187 = sand.u32 %s43, 1
        %s188 = smul.addr %s187, 32
        %s189 = scalar_lea.vmem [#allocation2], %s188
        // Predicated region
        $region33: #{tpu_custom_call.1} parent=31 // pred_check
          %p190 = pneg %p56
        $region34: #{tpu_custom_call.1} parent=31 // pred_check_branch
          %192 = sbr.rel (%p190) target = $region36
        $region35: #{tpu_custom_call.1} parent=31 // pred_region
          %193 = dma.done %s186, 512
        $region36: #{tpu_custom_call.1} parent=31 // pred_fallthru
          _
        // Predicated region
        $region37: #{tpu_custom_call.1} parent=31 // pred_check
          %p194 = pneg %p77
        $region38: #{tpu_custom_call.1} parent=31 // pred_check_branch
          %196 = sbr.rel (%p194) target = $region40
        $region39: #{tpu_custom_call.1} parent=31 // pred_region
          %197 = dma.done [#allocation6], 128
        $region40: #{tpu_custom_call.1} parent=31 // pred_fallthru
          _
        %s198 = sand.u32 %s43, 1
        %s199 = scalar_lea.sflag [#allocation3], %s198
        %s200 = sand.u32 %s43, 1
        %s201 = smul.addr %s200, 32
        %s202 = scalar_lea.vmem [#allocation2], %s201
        %p203 = pneg %p56
        %p204 = pneg %p53
        %p205 = pneg %p77
        %p206 = pneg %p74
        %p207 = pneg %p98
        %p208 = pneg %p95
        %p209 = pneg %p124
        %p210 = pneg %p121
        %s211 = sand.u32 %s111, 1
        %s212 = scalar_lea.sflag [#allocation4], %s211
        %s213 = sand.u32 %s111, 1
        %s214 = smul.addr %s213, 16
        %s215 = scalar_lea.vmem [#allocation7], %s214
        %s216 = sadd.s32 %s25, %s26
        %p218 = scmp.eq.s32.totalorder %s26, 0
        // Predicated region
        $region41: #{tpu_custom_call.1} parent=31 // pred_check
          %p219 = pneg %p218
        $region42: #{tpu_custom_call.1} parent=31 // pred_check_branch
          %221 = sbr.rel (%p219) target = $region44
        $region43: #{tpu_custom_call.1} parent=31 // pred_region
          %222 = vst [vmem:[%s215] sm:$0xff] 0.0
          %223 = vst [vmem:[%s215 + $0x8] sm:$0xff] 0.0
        $region44: #{tpu_custom_call.1} parent=31 // pred_fallthru
          _
        %v224 = vld [vmem:[#allocation5] sm:$0xff]
        %v225 = vld [vmem:[%s2] sm:$0x3]
        %v226 = vld [vmem:[%s189] sm:$0xf]
        %v227 = vld [vmem:[%s189 + $0x4] sm:$0xf]
        %v228 = vld [vmem:[%s189 + $0x8] sm:$0xf]
        %v229 = vld [vmem:[%s189 + $0xc] sm:$0xf]
        %v230 = vld [vmem:[%s189 + $0x10] sm:$0xf]
        %v231 = vld [vmem:[%s189 + $0x14] sm:$0xf]
        %v232 = vld [vmem:[%s189 + $0x18] sm:$0xf]
        %v233 = vld [vmem:[%s189 + $0x1c] sm:$0xf]
        %234 = vxpose.xlu0.c.b16.start [1/8] %v226, 128
        %235 = vxpose.xlu0.c.b16.cont [2/8] 0, 128
        %236 = vxpose.xlu0.c.b16.cont [3/8] 0, 128
        %237 = vxpose.xlu0.c.b16.cont [4/8] 0, 128
        %238 = vxpose.xlu0.c.b16.cont [5/8] 0, 128
        %239 = vxpose.xlu0.c.b16.cont [6/8] 0, 128
        %240 = vxpose.xlu0.c.b16.cont [7/8] 0, 128
        %241 = vxpose.xlu0.c.b16.end [8/8] 0, 128
        %v242 = vpop.trf.xlu0
        %v243 = vpop.trf.xlu0
        %v244 = vpop.trf.xlu0
        %v245 = vpop.trf.xlu0
        %v246 = vpop.trf.xlu0
        %v247 = vpop.trf.xlu0
        %v248 = vpop.trf.xlu0
        %v249 = vpop.trf.xlu0
        %250 = vxpose.xlu0.c.b16.start [1/8] %v227, 128
        %251 = vxpose.xlu0.c.b16.cont [2/8] 0, 128
        %252 = vxpose.xlu0.c.b16.cont [3/8] 0, 128
        %253 = vxpose.xlu0.c.b16.cont [4/8] 0, 128
        %254 = vxpose.xlu0.c.b16.cont [5/8] 0, 128
        %255 = vxpose.xlu0.c.b16.cont [6/8] 0, 128
        %256 = vxpose.xlu0.c.b16.cont [7/8] 0, 128
        %257 = vxpose.xlu0.c.b16.end [8/8] 0, 128
        %v258 = vpop.trf.xlu0
        %v259 = vpop.trf.xlu0
        %v260 = vpop.trf.xlu0
        %v261 = vpop.trf.xlu0
        %v262 = vpop.trf.xlu0
        %v263 = vpop.trf.xlu0
        %v264 = vpop.trf.xlu0
        %v265 = vpop.trf.xlu0
        %266 = vxpose.xlu0.c.b16.start [1/8] %v228, 128
        %267 = vxpose.xlu0.c.b16.cont [2/8] 0, 128
        %268 = vxpose.xlu0.c.b16.cont [3/8] 0, 128
        %269 = vxpose.xlu0.c.b16.cont [4/8] 0, 128
        %270 = vxpose.xlu0.c.b16.cont [5/8] 0, 128
        %271 = vxpose.xlu0.c.b16.cont [6/8] 0, 128
        %272 = vxpose.xlu0.c.b16.cont [7/8] 0, 128
        %273 = vxpose.xlu0.c.b16.end [8/8] 0, 128
        %v274 = vpop.trf.xlu0
        %v275 = vpop.trf.xlu0
        %v276 = vpop.trf.xlu0
        %v277 = vpop.trf.xlu0
        %v278 = vpop.trf.xlu0
        %v279 = vpop.trf.xlu0
        %v280 = vpop.trf.xlu0
        %v281 = vpop.trf.xlu0
        %282 = vxpose.xlu0.c.b16.start [1/8] %v229, 128
        %283 = vxpose.xlu0.c.b16.cont [2/8] 0, 128
        %284 = vxpose.xlu0.c.b16.cont [3/8] 0, 128
        %285 = vxpose.xlu0.c.b16.cont [4/8] 0, 128
        %286 = vxpose.xlu0.c.b16.cont [5/8] 0, 128
        %287 = vxpose.xlu0.c.b16.cont [6/8] 0, 128
        %288 = vxpose.xlu0.c.b16.cont [7/8] 0, 128
        %289 = vxpose.xlu0.c.b16.end [8/8] 0, 128
        %v290 = vpop.trf.xlu0
        %v291 = vpop.trf.xlu0
        %v292 = vpop.trf.xlu0
        %v293 = vpop.trf.xlu0
        %v294 = vpop.trf.xlu0
        %v295 = vpop.trf.xlu0
        %v296 = vpop.trf.xlu0
        %v297 = vpop.trf.xlu0
        %298 = vxpose.xlu0.c.b16.start [1/8] %v230, 128
        %299 = vxpose.xlu0.c.b16.cont [2/8] 0, 128
        %300 = vxpose.xlu0.c.b16.cont [3/8] 0, 128
        %301 = vxpose.xlu0.c.b16.cont [4/8] 0, 128
        %302 = vxpose.xlu0.c.b16.cont [5/8] 0, 128
        %303 = vxpose.xlu0.c.b16.cont [6/8] 0, 128
        %304 = vxpose.xlu0.c.b16.cont [7/8] 0, 128
        %305 = vxpose.xlu0.c.b16.end [8/8] 0, 128
        %v306 = vpop.trf.xlu0
        %v307 = vpop.trf.xlu0
        %v308 = vpop.trf.xlu0
        %v309 = vpop.trf.xlu0
        %v310 = vpop.trf.xlu0
        %v311 = vpop.trf.xlu0
        %v312 = vpop.trf.xlu0
        %v313 = vpop.trf.xlu0
        %314 = vxpose.xlu0.c.b16.start [1/8] %v231, 128
        %315 = vxpose.xlu0.c.b16.cont [2/8] 0, 128
        %316 = vxpose.xlu0.c.b16.cont [3/8] 0, 128
        %317 = vxpose.xlu0.c.b16.cont [4/8] 0, 128
        %318 = vxpose.xlu0.c.b16.cont [5/8] 0, 128
        %319 = vxpose.xlu0.c.b16.cont [6/8] 0, 128
        %320 = vxpose.xlu0.c.b16.cont [7/8] 0, 128
        %321 = vxpose.xlu0.c.b16.end [8/8] 0, 128
        %v322 = vpop.trf.xlu0
        %v323 = vpop.trf.xlu0
        %v324 = vpop.trf.xlu0
        %v325 = vpop.trf.xlu0
        %v326 = vpop.trf.xlu0
        %v327 = vpop.trf.xlu0
        %v328 = vpop.trf.xlu0
        %v329 = vpop.trf.xlu0
        %330 = vxpose.xlu0.c.b16.start [1/8] %v232, 128
        %331 = vxpose.xlu0.c.b16.cont [2/8] 0, 128
        %332 = vxpose.xlu0.c.b16.cont [3/8] 0, 128
        %333 = vxpose.xlu0.c.b16.cont [4/8] 0, 128
        %334 = vxpose.xlu0.c.b16.cont [5/8] 0, 128
        %335 = vxpose.xlu0.c.b16.cont [6/8] 0, 128
        %336 = vxpose.xlu0.c.b16.cont [7/8] 0, 128
        %337 = vxpose.xlu0.c.b16.end [8/8] 0, 128
        %v338 = vpop.trf.xlu0
        %v339 = vpop.trf.xlu0
        %v340 = vpop.trf.xlu0
        %v341 = vpop.trf.xlu0
        %v342 = vpop.trf.xlu0
        %v343 = vpop.trf.xlu0
        %v344 = vpop.trf.xlu0
        %v345 = vpop.trf.xlu0
        %346 = vxpose.xlu0.c.b16.start [1/8] %v233, 128
        %347 = vxpose.xlu0.c.b16.cont [2/8] 0, 128
        %348 = vxpose.xlu0.c.b16.cont [3/8] 0, 128
        %349 = vxpose.xlu0.c.b16.cont [4/8] 0, 128
        %350 = vxpose.xlu0.c.b16.cont [5/8] 0, 128
        %351 = vxpose.xlu0.c.b16.cont [6/8] 0, 128
        %352 = vxpose.xlu0.c.b16.cont [7/8] 0, 128
        %353 = vxpose.xlu0.c.b16.end [8/8] 0, 128
        %v354 = vpop.trf.xlu0
        %v355 = vpop.trf.xlu0
        %v356 = vpop.trf.xlu0
        %v357 = vpop.trf.xlu0
        %v358 = vpop.trf.xlu0
        %v359 = vpop.trf.xlu0
        %v360 = vpop.trf.xlu0
        %v361 = vpop.trf.xlu0
        %v363 = vlaneseq
        %v364 = vshrl.u32 %v363, 7
        %v365 = vsub.s32 0, %v364
        %v366 = vrot.slane %v225, %v365
        %v367 = vlaneseq
        %v368 = vshrl.u32 %v367, 7
        %v369 = vsub.s32 1, %v368
        %v370 = vrot.slane %v225, %v369
        %v374 = vunpack.c.l.b16 %v224
        %v375 = vunpack.c.h.b16 %v224
        %v376 = vpack.c.b16 %v374, %v374
        %v377 = vpack.c.b16 %v375, %v375
        %vm378 = vcmask 64512
        %v380 = vsel %vm378, %v242, 0
        %v383 = vsel %vm378, %v243, 0
        %v386 = vsel %vm378, %v244, 0
        %v389 = vsel %vm378, %v245, 0
        %v392 = vsel %vm378, %v246, 0
        %v395 = vsel %vm378, %v247, 0
        %v398 = vsel %vm378, %v248, 0
        %v401 = vsel %vm378, %v249, 0
        %v404 = vsel %vm378, %v258, 0
        %v407 = vsel %vm378, %v259, 0
        %v410 = vsel %vm378, %v260, 0
        %v413 = vsel %vm378, %v261, 0
        %v416 = vsel %vm378, %v262, 0
        %v419 = vsel %vm378, %v263, 0
        %v422 = vsel %vm378, %v264, 0
        %v425 = vsel %vm378, %v265, 0
        %v428 = vsel %vm378, %v274, 0
        %v431 = vsel %vm378, %v275, 0
        %v434 = vsel %vm378, %v276, 0
        %v437 = vsel %vm378, %v277, 0
        %v440 = vsel %vm378, %v278, 0
        %v443 = vsel %vm378, %v279, 0
        %v446 = vsel %vm378, %v280, 0
        %v449 = vsel %vm378, %v281, 0
        %v452 = vsel %vm378, %v290, 0
        %v455 = vsel %vm378, %v291, 0
        %v458 = vsel %vm378, %v292, 0
        %v461 = vsel %vm378, %v293, 0
        %v464 = vsel %vm378, %v294, 0
        %v467 = vsel %vm378, %v295, 0
        %v470 = vsel %vm378, %v296, 0
        %v473 = vsel %vm378, %v297, 0
        %v476 = vsel %vm378, %v306, 0
        %v479 = vsel %vm378, %v307, 0
        %v482 = vsel %vm378, %v308, 0
        %v485 = vsel %vm378, %v309, 0
        %v488 = vsel %vm378, %v310, 0
        %v491 = vsel %vm378, %v311, 0
        %v494 = vsel %vm378, %v312, 0
        %v497 = vsel %vm378, %v313, 0
        %v500 = vsel %vm378, %v322, 0
        %v503 = vsel %vm378, %v323, 0
        %v506 = vsel %vm378, %v324, 0
        %v509 = vsel %vm378, %v325, 0
        %v512 = vsel %vm378, %v326, 0
        %v515 = vsel %vm378, %v327, 0
        %v518 = vsel %vm378, %v328, 0
        %v521 = vsel %vm378, %v329, 0
        %v524 = vsel %vm378, %v338, 0
        %v527 = vsel %vm378, %v339, 0
        %v530 = vsel %vm378, %v340, 0
        %v533 = vsel %vm378, %v341, 0
        %v536 = vsel %vm378, %v342, 0
        %v539 = vsel %vm378, %v343, 0
        %v542 = vsel %vm378, %v344, 0
        %v545 = vsel %vm378, %v345, 0
        %v548 = vsel %vm378, %v354, 0
        %v551 = vsel %vm378, %v355, 0
        %v554 = vsel %vm378, %v356, 0
        %v557 = vsel %vm378, %v357, 0
        %v560 = vsel %vm378, %v358, 0
        %v563 = vsel %vm378, %v359, 0
        %v566 = vsel %vm378, %v360, 0
        %v569 = vsel %vm378, %v361, 0
        %vm571 = vcmask 1043456
        %v573 = vsel %vm571, %v376, 0
        %v576 = vsel %vm571, %v377, 0
        %578 = vmatprep.subr.bf16.mxu0 %v576
        %579 = vmatpush1.bf16.msra.mxu0 %v573
        %580 = vmatprep.subr.bf16.mxu0 0
        %581 = vmatpush1.bf16.msra.mxu0 0
        %582 = vmatprep.subr.bf16.mxu0 0
        %583 = vmatpush1.bf16.msra.mxu0 0
        %584 = vmatprep.subr.bf16.mxu0 0
        %585 = vmatpush1.bf16.msra.mxu0 0
        %586 = vmatprep.subr.bf16.mxu0 0
        %587 = vmatpush1.bf16.msra.mxu0 0
        %588 = vmatprep.subr.bf16.mxu0 0
        %589 = vmatpush1.bf16.msra.mxu0 0
        %590 = vmatprep.subr.bf16.mxu0 0
        %591 = vmatpush1.bf16.msra.mxu0 0
        %592 = vmatprep.subr.bf16.mxu0 0
        %593 = vmatpush1.bf16.msra.mxu0 0
        %594 = vmatprep.subr.bf16.mxu0 0
        %595 = vmatpush1.bf16.msra.mxu0 0
        %596 = vmatprep.subr.bf16.mxu0 0
        %597 = vmatpush1.bf16.msra.mxu0 0
        %598 = vmatprep.subr.bf16.mxu0 0
        %599 = vmatpush1.bf16.msra.mxu0 0
        %600 = vmatprep.subr.bf16.mxu0 0
        %601 = vmatpush1.bf16.msra.mxu0 0
        %602 = vmatprep.subr.bf16.mxu0 0
        %603 = vmatpush1.bf16.msra.mxu0 0
        %604 = vmatprep.subr.bf16.mxu0 0
        %605 = vmatpush1.bf16.msra.mxu0 0
        %606 = vmatprep.subr.bf16.mxu0 0
        %607 = vmatpush1.bf16.msra.mxu0 0
        %608 = vmatprep.subr.bf16.mxu0 0
        %609 = vmatpush1.bf16.msra.mxu0 0
        %610 = vmatprep.mubr.bf16.mxu0 0
        %611 = vmatmul.mubr.bf16.gmra.mrb[0].mxu0 %v380
        %v612 = vpop.f32.mrb[0].mxu0
        %v613 = vadd.f32 %v366, %v612
        %v614 = vpop.f32.mrb[0].mxu0
        %v615 = vadd.f32 %v370, %v614
        %v616 = vpop.f32.mrb[0].mxu0
        %v617 = vadd.f32 %v366, %v616
        %v618 = vpop.f32.mrb[0].mxu0
        %v619 = vadd.f32 %v370, %v618
        %620 = vmatprep.mubr.bf16.mxu0 0
        %621 = vmatmul.mubr.bf16.gmra.mrb[0].mxu0 %v383
        %v622 = vpop.f32.mrb[0].mxu0
        %v623 = vadd.f32 %v366, %v622
        %v624 = vpop.f32.mrb[0].mxu0
        %v625 = vadd.f32 %v370, %v624
        %v626 = vpop.f32.mrb[0].mxu0
        %v627 = vadd.f32 %v366, %v626
        %v628 = vpop.f32.mrb[0].mxu0
        %v629 = vadd.f32 %v370, %v628
        %630 = vmatprep.mubr.bf16.mxu0 0
        %631 = vmatmul.mubr.bf16.gmra.mrb[0].mxu0 %v386
        %v632 = vpop.f32.mrb[0].mxu0
        %v633 = vadd.f32 %v366, %v632
        %v634 = vpop.f32.mrb[0].mxu0
        %v635 = vadd.f32 %v370, %v634
        %v636 = vpop.f32.mrb[0].mxu0
        %v637 = vadd.f32 %v366, %v636
        %v638 = vpop.f32.mrb[0].mxu0
        %v639 = vadd.f32 %v370, %v638
        %640 = vmatprep.mubr.bf16.mxu0 0
        %641 = vmatmul.mubr.bf16.gmra.mrb[0].mxu0 %v389
        %v642 = vpop.f32.mrb[0].mxu0
        %v643 = vadd.f32 %v366, %v642
        %v644 = vpop.f32.mrb[0].mxu0
        %v645 = vadd.f32 %v370, %v644
        %v646 = vpop.f32.mrb[0].mxu0
        %v647 = vadd.f32 %v366, %v646
        %v648 = vpop.f32.mrb[0].mxu0
        %v649 = vadd.f32 %v370, %v648
        %650 = vmatprep.mubr.bf16.mxu0 0
        %651 = vmatmul.mubr.bf16.gmra.mrb[0].mxu0 %v392
        %v652 = vpop.f32.mrb[0].mxu0
        %v653 = vadd.f32 %v366, %v652
        %v654 = vpop.f32.mrb[0].mxu0
        %v655 = vadd.f32 %v370, %v654
        %v656 = vpop.f32.mrb[0].mxu0
        %v657 = vadd.f32 %v366, %v656
        %v658 = vpop.f32.mrb[0].mxu0
        %v659 = vadd.f32 %v370, %v658
        %660 = vmatprep.mubr.bf16.mxu0 0
        %661 = vmatmul.mubr.bf16.gmra.mrb[0].mxu0 %v395
        %v662 = vpop.f32.mrb[0].mxu0
        %v663 = vadd.f32 %v366, %v662
        %v664 = vpop.f32.mrb[0].mxu0
        %v665 = vadd.f32 %v370, %v664
        %v666 = vpop.f32.mrb[0].mxu0
        %v667 = vadd.f32 %v366, %v666
        %v668 = vpop.f32.mrb[0].mxu0
        %v669 = vadd.f32 %v370, %v668
        %670 = vmatprep.mubr.bf16.mxu0 0
        %671 = vmatmul.mubr.bf16.gmra.mrb[0].mxu0 %v398
        %v672 = vpop.f32.mrb[0].mxu0
        %v673 = vadd.f32 %v366, %v672
        %v674 = vpop.f32.mrb[0].mxu0
        %v675 = vadd.f32 %v370, %v674
        %v676 = vpop.f32.mrb[0].mxu0
        %v677 = vadd.f32 %v366, %v676
        %v678 = vpop.f32.mrb[0].mxu0
        %v679 = vadd.f32 %v370, %v678
        %680 = vmatprep.mubr.bf16.mxu0 0
        %681 = vmatmul.mubr.bf16.gmra.mrb[0].mxu0 %v401
        %v682 = vpop.f32.mrb[0].mxu0
        %v683 = vadd.f32 %v366, %v682
        %v684 = vpop.f32.mrb[0].mxu0
        %v685 = vadd.f32 %v370, %v684
        %v686 = vpop.f32.mrb[0].mxu0
        %v687 = vadd.f32 %v366, %v686
        %v688 = vpop.f32.mrb[0].mxu0
        %v689 = vadd.f32 %v370, %v688
        %690 = vmatprep.mubr.bf16.mxu0 0
        %691 = vmatmul.mubr.bf16.gmra.mrb[0].mxu0 %v404
        %v692 = vpop.f32.mrb[0].mxu0
        %v693 = vadd.f32 %v366, %v692
        %v694 = vpop.f32.mrb[0].mxu0
        %v695 = vadd.f32 %v370, %v694
        %v696 = vpop.f32.mrb[0].mxu0
        %v697 = vadd.f32 %v366, %v696
        %v698 = vpop.f32.mrb[0].mxu0
        %v699 = vadd.f32 %v370, %v698
        %700 = vmatprep.mubr.bf16.mxu0 0
        %701 = vmatmul.mubr.bf16.gmra.mrb[0].mxu0 %v407
        %v702 = vpop.f32.mrb[0].mxu0
        %v703 = vadd.f32 %v366, %v702
        %v704 = vpop.f32.mrb[0].mxu0
        %v705 = vadd.f32 %v370, %v704
        %v706 = vpop.f32.mrb[0].mxu0
        %v707 = vadd.f32 %v366, %v706
        %v708 = vpop.f32.mrb[0].mxu0
        %v709 = vadd.f32 %v370, %v708
        %710 = vmatprep.mubr.bf16.mxu0 0
        %711 = vmatmul.mubr.bf16.gmra.mrb[0].mxu0 %v410
        %v712 = vpop.f32.mrb[0].mxu0
        %v713 = vadd.f32 %v366, %v712
        %v714 = vpop.f32.mrb[0].mxu0
        %v715 = vadd.f32 %v370, %v714
        %v716 = vpop.f32.mrb[0].mxu0
        %v717 = vadd.f32 %v366, %v716
        %v718 = vpop.f32.mrb[0].mxu0
        %v719 = vadd.f32 %v370, %v718
        %720 = vmatprep.mubr.bf16.mxu0 0
        %721 = vmatmul.mubr.bf16.gmra.mrb[0].mxu0 %v413
        %v722 = vpop.f32.mrb[0].mxu0
        %v723 = vadd.f32 %v366, %v722
        %v724 = vpop.f32.mrb[0].mxu0
        %v725 = vadd.f32 %v370, %v724
        %v726 = vpop.f32.mrb[0].mxu0
        %v727 = vadd.f32 %v366, %v726
        %v728 = vpop.f32.mrb[0].mxu0
        %v729 = vadd.f32 %v370, %v728
        %730 = vmatprep.mubr.bf16.mxu0 0
        %731 = vmatmul.mubr.bf16.gmra.mrb[0].mxu0 %v416
        %v732 = vpop.f32.mrb[0].mxu0
        %v733 = vadd.f32 %v366, %v732
        %v734 = vpop.f32.mrb[0].mxu0
        %v735 = vadd.f32 %v370, %v734
        %v736 = vpop.f32.mrb[0].mxu0
        %v737 = vadd.f32 %v366, %v736
        %v738 = vpop.f32.mrb[0].mxu0
        %v739 = vadd.f32 %v370, %v738
        %740 = vmatprep.mubr.bf16.mxu0 0
        %741 = vmatmul.mubr.bf16.gmra.mrb[0].mxu0 %v419
        %v742 = vpop.f32.mrb[0].mxu0
        %v743 = vadd.f32 %v366, %v742
        %v744 = vpop.f32.mrb[0].mxu0
        %v745 = vadd.f32 %v370, %v744
        %v746 = vpop.f32.mrb[0].mxu0
        %v747 = vadd.f32 %v366, %v746
        %v748 = vpop.f32.mrb[0].mxu0
        %v749 = vadd.f32 %v370, %v748
        %750 = vmatprep.mubr.bf16.mxu0 0
        %751 = vmatmul.mubr.bf16.gmra.mrb[0].mxu0 %v422
        %v752 = vpop.f32.mrb[0].mxu0
        %v753 = vadd.f32 %v366, %v752
        %v754 = vpop.f32.mrb[0].mxu0
        %v755 = vadd.f32 %v370, %v754
        %v756 = vpop.f32.mrb[0].mxu0
        %v757 = vadd.f32 %v366, %v756
        %v758 = vpop.f32.mrb[0].mxu0
        %v759 = vadd.f32 %v370, %v758
        %760 = vmatprep.mubr.bf16.mxu0 0
        %761 = vmatmul.mubr.bf16.gmra.mrb[0].mxu0 %v425
        %v762 = vpop.f32.mrb[0].mxu0
        %v763 = vadd.f32 %v366, %v762
        %v764 = vpop.f32.mrb[0].mxu0
        %v765 = vadd.f32 %v370, %v764
        %v766 = vpop.f32.mrb[0].mxu0
        %v767 = vadd.f32 %v366, %v766
        %v768 = vpop.f32.mrb[0].mxu0
        %v769 = vadd.f32 %v370, %v768
        %770 = vmatprep.mubr.bf16.mxu0 0
        %771 = vmatmul.mubr.bf16.gmra.mrb[0].mxu0 %v428
        %v772 = vpop.f32.mrb[0].mxu0
        %v773 = vadd.f32 %v366, %v772
        %v774 = vpop.f32.mrb[0].mxu0
        %v775 = vadd.f32 %v370, %v774
        %v776 = vpop.f32.mrb[0].mxu0
        %v777 = vadd.f32 %v366, %v776
        %v778 = vpop.f32.mrb[0].mxu0
        %v779 = vadd.f32 %v370, %v778
        %780 = vmatprep.mubr.bf16.mxu0 0
        %781 = vmatmul.mubr.bf16.gmra.mrb[0].mxu0 %v431
        %v782 = vpop.f32.mrb[0].mxu0
        %v783 = vadd.f32 %v366, %v782
        %v784 = vpop.f32.mrb[0].mxu0
        %v785 = vadd.f32 %v370, %v784
        %v786 = vpop.f32.mrb[0].mxu0
        %v787 = vadd.f32 %v366, %v786
        %v788 = vpop.f32.mrb[0].mxu0
        %v789 = vadd.f32 %v370, %v788
        %790 = vmatprep.mubr.bf16.mxu0 0
        %791 = vmatmul.mubr.bf16.gmra.mrb[0].mxu0 %v434
        %v792 = vpop.f32.mrb[0].mxu0
        %v793 = vadd.f32 %v366, %v792
        %v794 = vpop.f32.mrb[0].mxu0
        %v795 = vadd.f32 %v370, %v794
        %v796 = vpop.f32.mrb[0].mxu0
        %v797 = vadd.f32 %v366, %v796
        %v798 = vpop.f32.mrb[0].mxu0
        %v799 = vadd.f32 %v370, %v798
        %800 = vmatprep.mubr.bf16.mxu0 0
        %801 = vmatmul.mubr.bf16.gmra.mrb[0].mxu0 %v437
        %v802 = vpop.f32.mrb[0].mxu0
        %v803 = vadd.f32 %v366, %v802
        %v804 = vpop.f32.mrb[0].mxu0
        %v805 = vadd.f32 %v370, %v804
        %v806 = vpop.f32.mrb[0].mxu0
        %v807 = vadd.f32 %v366, %v806
        %v808 = vpop.f32.mrb[0].mxu0
        %v809 = vadd.f32 %v370, %v808
        %810 = vmatprep.mubr.bf16.mxu0 0
        %811 = vmatmul.mubr.bf16.gmra.mrb[0].mxu0 %v440
        %v812 = vpop.f32.mrb[0].mxu0
        %v813 = vadd.f32 %v366, %v812
        %v814 = vpop.f32.mrb[0].mxu0
        %v815 = vadd.f32 %v370, %v814
        %v816 = vpop.f32.mrb[0].mxu0
        %v817 = vadd.f32 %v366, %v816
        %v818 = vpop.f32.mrb[0].mxu0
        %v819 = vadd.f32 %v370, %v818
        %820 = vmatprep.mubr.bf16.mxu0 0
        %821 = vmatmul.mubr.bf16.gmra.mrb[0].mxu0 %v443
        %v822 = vpop.f32.mrb[0].mxu0
        %v823 = vadd.f32 %v366, %v822
        %v824 = vpop.f32.mrb[0].mxu0
        %v825 = vadd.f32 %v370, %v824
        %v826 = vpop.f32.mrb[0].mxu0
        %v827 = vadd.f32 %v366, %v826
        %v828 = vpop.f32.mrb[0].mxu0
        %v829 = vadd.f32 %v370, %v828
        %830 = vmatprep.mubr.bf16.mxu0 0
        %831 = vmatmul.mubr.bf16.gmra.mrb[0].mxu0 %v446
        %v832 = vpop.f32.mrb[0].mxu0
        %v833 = vadd.f32 %v366, %v832
        %v834 = vpop.f32.mrb[0].mxu0
        %v835 = vadd.f32 %v370, %v834
        %v836 = vpop.f32.mrb[0].mxu0
        %v837 = vadd.f32 %v366, %v836
        %v838 = vpop.f32.mrb[0].mxu0
        %v839 = vadd.f32 %v370, %v838
        %840 = vmatprep.mubr.bf16.mxu0 0
        %841 = vmatmul.mubr.bf16.gmra.mrb[0].mxu0 %v449
        %v842 = vpop.f32.mrb[0].mxu0
        %v843 = vadd.f32 %v366, %v842
        %v844 = vpop.f32.mrb[0].mxu0
        %v845 = vadd.f32 %v370, %v844
        %v846 = vpop.f32.mrb[0].mxu0
        %v847 = vadd.f32 %v366, %v846
        %v848 = vpop.f32.mrb[0].mxu0
        %v849 = vadd.f32 %v370, %v848
        %850 = vmatprep.mubr.bf16.mxu0 0
        %851 = vmatmul.mubr.bf16.gmra.mrb[0].mxu0 %v452
        %v852 = vpop.f32.mrb[0].mxu0
        %v853 = vadd.f32 %v366, %v852
        %v854 = vpop.f32.mrb[0].mxu0
        %v855 = vadd.f32 %v370, %v854
        %v856 = vpop.f32.mrb[0].mxu0
        %v857 = vadd.f32 %v366, %v856
        %v858 = vpop.f32.mrb[0].mxu0
        %v859 = vadd.f32 %v370, %v858
        %860 = vmatprep.mubr.bf16.mxu0 0
        %861 = vmatmul.mubr.bf16.gmra.mrb[0].mxu0 %v455
        %v862 = vpop.f32.mrb[0].mxu0
        %v863 = vadd.f32 %v366, %v862
        %v864 = vpop.f32.mrb[0].mxu0
        %v865 = vadd.f32 %v370, %v864
        %v866 = vpop.f32.mrb[0].mxu0
        %v867 = vadd.f32 %v366, %v866
        %v868 = vpop.f32.mrb[0].mxu0
        %v869 = vadd.f32 %v370, %v868
        %870 = vmatprep.mubr.bf16.mxu0 0
        %871 = vmatmul.mubr.bf16.gmra.mrb[0].mxu0 %v458
        %v872 = vpop.f32.mrb[0].mxu0
        %v873 = vadd.f32 %v366, %v872
        %v874 = vpop.f32.mrb[0].mxu0
        %v875 = vadd.f32 %v370, %v874
        %v876 = vpop.f32.mrb[0].mxu0
        %v877 = vadd.f32 %v366, %v876
        %v878 = vpop.f32.mrb[0].mxu0
        %v879 = vadd.f32 %v370, %v878
        %880 = vmatprep.mubr.bf16.mxu0 0
        %881 = vmatmul.mubr.bf16.gmra.mrb[0].mxu0 %v461
        %v882 = vpop.f32.mrb[0].mxu0
        %v883 = vadd.f32 %v366, %v882
        %v884 = vpop.f32.mrb[0].mxu0
        %v885 = vadd.f32 %v370, %v884
        %v886 = vpop.f32.mrb[0].mxu0
        %v887 = vadd.f32 %v366, %v886
        %v888 = vpop.f32.mrb[0].mxu0
        %v889 = vadd.f32 %v370, %v888
        %890 = vmatprep.mubr.bf16.mxu0 0
        %891 = vmatmul.mubr.bf16.gmra.mrb[0].mxu0 %v464
        %v892 = vpop.f32.mrb[0].mxu0
        %v893 = vadd.f32 %v366, %v892
        %v894 = vpop.f32.mrb[0].mxu0
        %v895 = vadd.f32 %v370, %v894
        %v896 = vpop.f32.mrb[0].mxu0
        %v897 = vadd.f32 %v366, %v896
        %v898 = vpop.f32.mrb[0].mxu0
        %v899 = vadd.f32 %v370, %v898
        %900 = vmatprep.mubr.bf16.mxu0 0
        %901 = vmatmul.mubr.bf16.gmra.mrb[0].mxu0 %v467
        %v902 = vpop.f32.mrb[0].mxu0
        %v903 = vadd.f32 %v366, %v902
        %v904 = vpop.f32.mrb[0].mxu0
        %v905 = vadd.f32 %v370, %v904
        %v906 = vpop.f32.mrb[0].mxu0
        %v907 = vadd.f32 %v366, %v906
        %v908 = vpop.f32.mrb[0].mxu0
        %v909 = vadd.f32 %v370, %v908
        %910 = vmatprep.mubr.bf16.mxu0 0
        %911 = vmatmul.mubr.bf16.gmra.mrb[0].mxu0 %v470
        %v912 = vpop.f32.mrb[0].mxu0
        %v913 = vadd.f32 %v366, %v912
        %v914 = vpop.f32.mrb[0].mxu0
        %v915 = vadd.f32 %v370, %v914
        %v916 = vpop.f32.mrb[0].mxu0
        %v917 = vadd.f32 %v366, %v916
        %v918 = vpop.f32.mrb[0].mxu0
        %v919 = vadd.f32 %v370, %v918
        %920 = vmatprep.mubr.bf16.mxu0 0
        %921 = vmatmul.mubr.bf16.gmra.mrb[0].mxu0 %v473
        %v922 = vpop.f32.mrb[0].mxu0
        %v923 = vadd.f32 %v366, %v922
        %v924 = vpop.f32.mrb[0].mxu0
        %v925 = vadd.f32 %v370, %v924
        %v926 = vpop.f32.mrb[0].mxu0
        %v927 = vadd.f32 %v366, %v926
        %v928 = vpop.f32.mrb[0].mxu0
        %v929 = vadd.f32 %v370, %v928
        %930 = vmatprep.mubr.bf16.mxu0 0
        %931 = vmatmul.mubr.bf16.gmra.mrb[0].mxu0 %v476
        %v932 = vpop.f32.mrb[0].mxu0
        %v933 = vadd.f32 %v366, %v932
        %v934 = vpop.f32.mrb[0].mxu0
        %v935 = vadd.f32 %v370, %v934
        %v936 = vpop.f32.mrb[0].mxu0
        %v937 = vadd.f32 %v366, %v936
        %v938 = vpop.f32.mrb[0].mxu0
        %v939 = vadd.f32 %v370, %v938
        %940 = vmatprep.mubr.bf16.mxu0 0
        %941 = vmatmul.mubr.bf16.gmra.mrb[0].mxu0 %v479
        %v942 = vpop.f32.mrb[0].mxu0
        %v943 = vadd.f32 %v366, %v942
        %v944 = vpop.f32.mrb[0].mxu0
        %v945 = vadd.f32 %v370, %v944
        %v946 = vpop.f32.mrb[0].mxu0
        %v947 = vadd.f32 %v366, %v946
        %v948 = vpop.f32.mrb[0].mxu0
        %v949 = vadd.f32 %v370, %v948
        %950 = vmatprep.mubr.bf16.mxu0 0
        %951 = vmatmul.mubr.bf16.gmra.mrb[0].mxu0 %v482
        %v952 = vpop.f32.mrb[0].mxu0
        %v953 = vadd.f32 %v366, %v952
        %v954 = vpop.f32.mrb[0].mxu0
        %v955 = vadd.f32 %v370, %v954
        %v956 = vpop.f32.mrb[0].mxu0
        %v957 = vadd.f32 %v366, %v956
        %v958 = vpop.f32.mrb[0].mxu0
        %v959 = vadd.f32 %v370, %v958
        %960 = vmatprep.mubr.bf16.mxu0 0
        %961 = vmatmul.mubr.bf16.gmra.mrb[0].mxu0 %v485
        %v962 = vpop.f32.mrb[0].mxu0
        %v963 = vadd.f32 %v366, %v962
        %v964 = vpop.f32.mrb[0].mxu0
        %v965 = vadd.f32 %v370, %v964
        %v966 = vpop.f32.mrb[0].mxu0
        %v967 = vadd.f32 %v366, %v966
        %v968 = vpop.f32.mrb[0].mxu0
        %v969 = vadd.f32 %v370, %v968
        %970 = vmatprep.mubr.bf16.mxu0 0
        %971 = vmatmul.mubr.bf16.gmra.mrb[0].mxu0 %v488
        %v972 = vpop.f32.mrb[0].mxu0
        %v973 = vadd.f32 %v366, %v972
        %v974 = vpop.f32.mrb[0].mxu0
        %v975 = vadd.f32 %v370, %v974
        %v976 = vpop.f32.mrb[0].mxu0
        %v977 = vadd.f32 %v366, %v976
        %v978 = vpop.f32.mrb[0].mxu0
        %v979 = vadd.f32 %v370, %v978
        %980 = vmatprep.mubr.bf16.mxu0 0
        %981 = vmatmul.mubr.bf16.gmra.mrb[0].mxu0 %v491
        %v982 = vpop.f32.mrb[0].mxu0
        %v983 = vadd.f32 %v366, %v982
        %v984 = vpop.f32.mrb[0].mxu0
        %v985 = vadd.f32 %v370, %v984
        %v986 = vpop.f32.mrb[0].mxu0
        %v987 = vadd.f32 %v366, %v986
        %v988 = vpop.f32.mrb[0].mxu0
        %v989 = vadd.f32 %v370, %v988
        %990 = vmatprep.mubr.bf16.mxu0 0
        %991 = vmatmul.mubr.bf16.gmra.mrb[0].mxu0 %v494
        %v992 = vpop.f32.mrb[0].mxu0
        %v993 = vadd.f32 %v366, %v992
        %v994 = vpop.f32.mrb[0].mxu0
        %v995 = vadd.f32 %v370, %v994
        %v996 = vpop.f32.mrb[0].mxu0
        %v997 = vadd.f32 %v366, %v996
        %v998 = vpop.f32.mrb[0].mxu0
        %v999 = vadd.f32 %v370, %v998
        %1000 = vmatprep.mubr.bf16.mxu0 0
        %1001 = vmatmul.mubr.bf16.gmra.mrb[0].mxu0 %v497
        %v1002 = vpop.f32.mrb[0].mxu0
        %v1003 = vadd.f32 %v366, %v1002
        %v1004 = vpop.f32.mrb[0].mxu0
        %v1005 = vadd.f32 %v370, %v1004
        %v1006 = vpop.f32.mrb[0].mxu0
        %v1007 = vadd.f32 %v366, %v1006
        %v1008 = vpop.f32.mrb[0].mxu0
        %v1009 = vadd.f32 %v370, %v1008
        %1010 = vmatprep.mubr.bf16.mxu0 0
        %1011 = vmatmul.mubr.bf16.gmra.mrb[0].mxu0 %v500
        %v1012 = vpop.f32.mrb[0].mxu0
        %v1013 = vadd.f32 %v366, %v1012
        %v1014 = vpop.f32.mrb[0].mxu0
        %v1015 = vadd.f32 %v370, %v1014
        %v1016 = vpop.f32.mrb[0].mxu0
        %v1017 = vadd.f32 %v366, %v1016
        %v1018 = vpop.f32.mrb[0].mxu0
        %v1019 = vadd.f32 %v370, %v1018
        %1020 = vmatprep.mubr.bf16.mxu0 0
        %1021 = vmatmul.mubr.bf16.gmra.mrb[0].mxu0 %v503
        %v1022 = vpop.f32.mrb[0].mxu0
        %v1023 = vadd.f32 %v366, %v1022
        %v1024 = vpop.f32.mrb[0].mxu0
        %v1025 = vadd.f32 %v370, %v1024
        %v1026 = vpop.f32.mrb[0].mxu0
        %v1027 = vadd.f32 %v366, %v1026
        %v1028 = vpop.f32.mrb[0].mxu0
        %v1029 = vadd.f32 %v370, %v1028
        %1030 = vmatprep.mubr.bf16.mxu0 0
        %1031 = vmatmul.mubr.bf16.gmra.mrb[0].mxu0 %v506
        %v1032 = vpop.f32.mrb[0].mxu0
        %v1033 = vadd.f32 %v366, %v1032
        %v1034 = vpop.f32.mrb[0].mxu0
        %v1035 = vadd.f32 %v370, %v1034
        %v1036 = vpop.f32.mrb[0].mxu0
        %v1037 = vadd.f32 %v366, %v1036
        %v1038 = vpop.f32.mrb[0].mxu0
        %v1039 = vadd.f32 %v370, %v1038
        %1040 = vmatprep.mubr.bf16.mxu0 0
        %1041 = vmatmul.mubr.bf16.gmra.mrb[0].mxu0 %v509
        %v1042 = vpop.f32.mrb[0].mxu0
        %v1043 = vadd.f32 %v366, %v1042
        %v1044 = vpop.f32.mrb[0].mxu0
        %v1045 = vadd.f32 %v370, %v1044
        %v1046 = vpop.f32.mrb[0].mxu0
        %v1047 = vadd.f32 %v366, %v1046
        %v1048 = vpop.f32.mrb[0].mxu0
        %v1049 = vadd.f32 %v370, %v1048
        %1050 = vmatprep.mubr.bf16.mxu0 0
        %1051 = vmatmul.mubr.bf16.gmra.mrb[0].mxu0 %v512
        %v1052 = vpop.f32.mrb[0].mxu0
        %v1053 = vadd.f32 %v366, %v1052
        %v1054 = vpop.f32.mrb[0].mxu0
        %v1055 = vadd.f32 %v370, %v1054
        %v1056 = vpop.f32.mrb[0].mxu0
        %v1057 = vadd.f32 %v366, %v1056
        %v1058 = vpop.f32.mrb[0].mxu0
        %v1059 = vadd.f32 %v370, %v1058
        %1060 = vmatprep.mubr.bf16.mxu0 0
        %1061 = vmatmul.mubr.bf16.gmra.mrb[0].mxu0 %v515
        %v1062 = vpop.f32.mrb[0].mxu0
        %v1063 = vadd.f32 %v366, %v1062
        %v1064 = vpop.f32.mrb[0].mxu0
        %v1065 = vadd.f32 %v370, %v1064
        %v1066 = vpop.f32.mrb[0].mxu0
        %v1067 = vadd.f32 %v366, %v1066
        %v1068 = vpop.f32.mrb[0].mxu0
        %v1069 = vadd.f32 %v370, %v1068
        %1070 = vmatprep.mubr.bf16.mxu0 0
        %1071 = vmatmul.mubr.bf16.gmra.mrb[0].mxu0 %v518
        %v1072 = vpop.f32.mrb[0].mxu0
        %v1073 = vadd.f32 %v366, %v1072
        %v1074 = vpop.f32.mrb[0].mxu0
        %v1075 = vadd.f32 %v370, %v1074
        %v1076 = vpop.f32.mrb[0].mxu0
        %v1077 = vadd.f32 %v366, %v1076
        %v1078 = vpop.f32.mrb[0].mxu0
        %v1079 = vadd.f32 %v370, %v1078
        %1080 = vmatprep.mubr.bf16.mxu0 0
        %1081 = vmatmul.mubr.bf16.gmra.mrb[0].mxu0 %v521
        %v1082 = vpop.f32.mrb[0].mxu0
        %v1083 = vadd.f32 %v366, %v1082
        %v1084 = vpop.f32.mrb[0].mxu0
        %v1085 = vadd.f32 %v370, %v1084
        %v1086 = vpop.f32.mrb[0].mxu0
        %v1087 = vadd.f32 %v366, %v1086
        %v1088 = vpop.f32.mrb[0].mxu0
        %v1089 = vadd.f32 %v370, %v1088
        %1090 = vmatprep.mubr.bf16.mxu0 0
        %1091 = vmatmul.mubr.bf16.gmra.mrb[0].mxu0 %v524
        %v1092 = vpop.f32.mrb[0].mxu0
        %v1093 = vadd.f32 %v366, %v1092
        %v1094 = vpop.f32.mrb[0].mxu0
        %v1095 = vadd.f32 %v370, %v1094
        %v1096 = vpop.f32.mrb[0].mxu0
        %v1097 = vadd.f32 %v366, %v1096
        %v1098 = vpop.f32.mrb[0].mxu0
        %v1099 = vadd.f32 %v370, %v1098
        %1100 = vmatprep.mubr.bf16.mxu0 0
        %1101 = vmatmul.mubr.bf16.gmra.mrb[0].mxu0 %v527
        %v1102 = vpop.f32.mrb[0].mxu0
        %v1103 = vadd.f32 %v366, %v1102
        %v1104 = vpop.f32.mrb[0].mxu0
        %v1105 = vadd.f32 %v370, %v1104
        %v1106 = vpop.f32.mrb[0].mxu0
        %v1107 = vadd.f32 %v366, %v1106
        %v1108 = vpop.f32.mrb[0].mxu0
        %v1109 = vadd.f32 %v370, %v1108
        %1110 = vmatprep.mubr.bf16.mxu0 0
        %1111 = vmatmul.mubr.bf16.gmra.mrb[0].mxu0 %v530
        %v1112 = vpop.f32.mrb[0].mxu0
        %v1113 = vadd.f32 %v366, %v1112
        %v1114 = vpop.f32.mrb[0].mxu0
        %v1115 = vadd.f32 %v370, %v1114
        %v1116 = vpop.f32.mrb[0].mxu0
        %v1117 = vadd.f32 %v366, %v1116
        %v1118 = vpop.f32.mrb[0].mxu0
        %v1119 = vadd.f32 %v370, %v1118
        %1120 = vmatprep.mubr.bf16.mxu0 0
        %1121 = vmatmul.mubr.bf16.gmra.mrb[0].mxu0 %v533
        %v1122 = vpop.f32.mrb[0].mxu0
        %v1123 = vadd.f32 %v366, %v1122
        %v1124 = vpop.f32.mrb[0].mxu0
        %v1125 = vadd.f32 %v370, %v1124
        %v1126 = vpop.f32.mrb[0].mxu0
        %v1127 = vadd.f32 %v366, %v1126
        %v1128 = vpop.f32.mrb[0].mxu0
        %v1129 = vadd.f32 %v370, %v1128
        %1130 = vmatprep.mubr.bf16.mxu0 0
        %1131 = vmatmul.mubr.bf16.gmra.mrb[0].mxu0 %v536
        %v1132 = vpop.f32.mrb[0].mxu0
        %v1133 = vadd.f32 %v366, %v1132
        %v1134 = vpop.f32.mrb[0].mxu0
        %v1135 = vadd.f32 %v370, %v1134
        %v1136 = vpop.f32.mrb[0].mxu0
        %v1137 = vadd.f32 %v366, %v1136
        %v1138 = vpop.f32.mrb[0].mxu0
        %v1139 = vadd.f32 %v370, %v1138
        %1140 = vmatprep.mubr.bf16.mxu0 0
        %1141 = vmatmul.mubr.bf16.gmra.mrb[0].mxu0 %v539
        %v1142 = vpop.f32.mrb[0].mxu0
        %v1143 = vadd.f32 %v366, %v1142
        %v1144 = vpop.f32.mrb[0].mxu0
        %v1145 = vadd.f32 %v370, %v1144
        %v1146 = vpop.f32.mrb[0].mxu0
        %v1147 = vadd.f32 %v366, %v1146
        %v1148 = vpop.f32.mrb[0].mxu0
        %v1149 = vadd.f32 %v370, %v1148
        %1150 = vmatprep.mubr.bf16.mxu0 0
        %1151 = vmatmul.mubr.bf16.gmra.mrb[0].mxu0 %v542
        %v1152 = vpop.f32.mrb[0].mxu0
        %v1153 = vadd.f32 %v366, %v1152
        %v1154 = vpop.f32.mrb[0].mxu0
        %v1155 = vadd.f32 %v370, %v1154
        %v1156 = vpop.f32.mrb[0].mxu0
        %v1157 = vadd.f32 %v366, %v1156
        %v1158 = vpop.f32.mrb[0].mxu0
        %v1159 = vadd.f32 %v370, %v1158
        %1160 = vmatprep.mubr.bf16.mxu0 0
        %1161 = vmatmul.mubr.bf16.gmra.mrb[0].mxu0 %v545
        %v1162 = vpop.f32.mrb[0].mxu0
        %v1163 = vadd.f32 %v366, %v1162
        %v1164 = vpop.f32.mrb[0].mxu0
        %v1165 = vadd.f32 %v370, %v1164
        %v1166 = vpop.f32.mrb[0].mxu0
        %v1167 = vadd.f32 %v366, %v1166
        %v1168 = vpop.f32.mrb[0].mxu0
        %v1169 = vadd.f32 %v370, %v1168
        %1170 = vmatprep.mubr.bf16.mxu0 0
        %1171 = vmatmul.mubr.bf16.gmra.mrb[0].mxu0 %v548
        %v1172 = vpop.f32.mrb[0].mxu0
        %v1173 = vadd.f32 %v366, %v1172
        %v1174 = vpop.f32.mrb[0].mxu0
        %v1175 = vadd.f32 %v370, %v1174
        %v1176 = vpop.f32.mrb[0].mxu0
        %v1177 = vadd.f32 %v366, %v1176
        %v1178 = vpop.f32.mrb[0].mxu0
        %v1179 = vadd.f32 %v370, %v1178
        %1180 = vmatprep.mubr.bf16.mxu0 0
        %1181 = vmatmul.mubr.bf16.gmra.mrb[0].mxu0 %v551
        %v1182 = vpop.f32.mrb[0].mxu0
        %v1183 = vadd.f32 %v366, %v1182
        %v1184 = vpop.f32.mrb[0].mxu0
        %v1185 = vadd.f32 %v370, %v1184
        %v1186 = vpop.f32.mrb[0].mxu0
        %v1187 = vadd.f32 %v366, %v1186
        %v1188 = vpop.f32.mrb[0].mxu0
        %v1189 = vadd.f32 %v370, %v1188
        %1190 = vmatprep.mubr.bf16.mxu0 0
        %1191 = vmatmul.mubr.bf16.gmra.mrb[0].mxu0 %v554
        %v1192 = vpop.f32.mrb[0].mxu0
        %v1193 = vadd.f32 %v366, %v1192
        %v1194 = vpop.f32.mrb[0].mxu0
        %v1195 = vadd.f32 %v370, %v1194
        %v1196 = vpop.f32.mrb[0].mxu0
        %v1197 = vadd.f32 %v366, %v1196
        %v1198 = vpop.f32.mrb[0].mxu0
        %v1199 = vadd.f32 %v370, %v1198
        %1200 = vmatprep.mubr.bf16.mxu0 0
        %1201 = vmatmul.mubr.bf16.gmra.mrb[0].mxu0 %v557
        %v1202 = vpop.f32.mrb[0].mxu0
        %v1203 = vadd.f32 %v366, %v1202
        %v1204 = vpop.f32.mrb[0].mxu0
        %v1205 = vadd.f32 %v370, %v1204
        %v1206 = vpop.f32.mrb[0].mxu0
        %v1207 = vadd.f32 %v366, %v1206
        %v1208 = vpop.f32.mrb[0].mxu0
        %v1209 = vadd.f32 %v370, %v1208
        %1210 = vmatprep.mubr.bf16.mxu0 0
        %1211 = vmatmul.mubr.bf16.gmra.mrb[0].mxu0 %v560
        %v1212 = vpop.f32.mrb[0].mxu0
        %v1213 = vadd.f32 %v366, %v1212
        %v1214 = vpop.f32.mrb[0].mxu0
        %v1215 = vadd.f32 %v370, %v1214
        %v1216 = vpop.f32.mrb[0].mxu0
        %v1217 = vadd.f32 %v366, %v1216
        %v1218 = vpop.f32.mrb[0].mxu0
        %v1219 = vadd.f32 %v370, %v1218
        %1220 = vmatprep.mubr.bf16.mxu0 0
        %1221 = vmatmul.mubr.bf16.gmra.mrb[0].mxu0 %v563
        %v1222 = vpop.f32.mrb[0].mxu0
        %v1223 = vadd.f32 %v366, %v1222
        %v1224 = vpop.f32.mrb[0].mxu0
        %v1225 = vadd.f32 %v370, %v1224
        %v1226 = vpop.f32.mrb[0].mxu0
        %v1227 = vadd.f32 %v366, %v1226
        %v1228 = vpop.f32.mrb[0].mxu0
        %v1229 = vadd.f32 %v370, %v1228
        %1230 = vmatprep.mubr.bf16.mxu0 0
        %1231 = vmatmul.mubr.bf16.gmra.mrb[0].mxu0 %v566
        %v1232 = vpop.f32.mrb[0].mxu0
        %v1233 = vadd.f32 %v366, %v1232
        %v1234 = vpop.f32.mrb[0].mxu0
        %v1235 = vadd.f32 %v370, %v1234
        %v1236 = vpop.f32.mrb[0].mxu0
        %v1237 = vadd.f32 %v366, %v1236
        %v1238 = vpop.f32.mrb[0].mxu0
        %v1239 = vadd.f32 %v370, %v1238
        %1240 = vmatprep.mubr.bf16.mxu0 0
        %1241 = vmatmul.mubr.bf16.gmra.mrb[0].mxu0 %v569
        %v1242 = vpop.f32.mrb[0].mxu0
        %v1243 = vadd.f32 %v366, %v1242
        %v1244 = vpop.f32.mrb[0].mxu0
        %v1245 = vadd.f32 %v370, %v1244
        %v1246 = vpop.f32.mrb[0].mxu0
        %v1247 = vadd.f32 %v366, %v1246
        %v1248 = vpop.f32.mrb[0].mxu0
        %v1249 = vadd.f32 %v370, %v1248
        %1250 = vdwg.mxu0
        %v1251 = vmax.f32 %v613, 0.0
        %v1252 = vmax.f32 %v615, 0.0
        %v1253 = vmax.f32 %v617, 0.0
        %v1254 = vmax.f32 %v619, 0.0
        %v1255 = vmax.f32 %v623, 0.0
        %v1256 = vmax.f32 %v625, 0.0
        %v1257 = vmax.f32 %v627, 0.0
        %v1258 = vmax.f32 %v629, 0.0
        %v1259 = vmax.f32 %v633, 0.0
        %v1260 = vmax.f32 %v635, 0.0
        %v1261 = vmax.f32 %v637, 0.0
        %v1262 = vmax.f32 %v639, 0.0
        %v1263 = vmax.f32 %v643, 0.0
        %v1264 = vmax.f32 %v645, 0.0
        %v1265 = vmax.f32 %v647, 0.0
        %v1266 = vmax.f32 %v649, 0.0
        %v1267 = vmax.f32 %v653, 0.0
        %v1268 = vmax.f32 %v655, 0.0
        %v1269 = vmax.f32 %v657, 0.0
        %v1270 = vmax.f32 %v659, 0.0
        %v1271 = vmax.f32 %v663, 0.0
        %v1272 = vmax.f32 %v665, 0.0
        %v1273 = vmax.f32 %v667, 0.0
        %v1274 = vmax.f32 %v669, 0.0
        %v1275 = vmax.f32 %v673, 0.0
        %v1276 = vmax.f32 %v675, 0.0
        %v1277 = vmax.f32 %v677, 0.0
        %v1278 = vmax.f32 %v679, 0.0
        %v1279 = vmax.f32 %v683, 0.0
        %v1280 = vmax.f32 %v685, 0.0
        %v1281 = vmax.f32 %v687, 0.0
        %v1282 = vmax.f32 %v689, 0.0
        %v1283 = vmax.f32 %v693, 0.0
        %v1284 = vmax.f32 %v695, 0.0
        %v1285 = vmax.f32 %v697, 0.0
        %v1286 = vmax.f32 %v699, 0.0
        %v1287 = vmax.f32 %v703, 0.0
        %v1288 = vmax.f32 %v705, 0.0
        %v1289 = vmax.f32 %v707, 0.0
        %v1290 = vmax.f32 %v709, 0.0
        %v1291 = vmax.f32 %v713, 0.0
        %v1292 = vmax.f32 %v715, 0.0
        %v1293 = vmax.f32 %v717, 0.0
        %v1294 = vmax.f32 %v719, 0.0
        %v1295 = vmax.f32 %v723, 0.0
        %v1296 = vmax.f32 %v725, 0.0
        %v1297 = vmax.f32 %v727, 0.0
        %v1298 = vmax.f32 %v729, 0.0
        %v1299 = vmax.f32 %v733, 0.0
        %v1300 = vmax.f32 %v735, 0.0
        %v1301 = vmax.f32 %v737, 0.0
        %v1302 = vmax.f32 %v739, 0.0
        %v1303 = vmax.f32 %v743, 0.0
        %v1304 = vmax.f32 %v745, 0.0
        %v1305 = vmax.f32 %v747, 0.0
        %v1306 = vmax.f32 %v749, 0.0
        %v1307 = vmax.f32 %v753, 0.0
        %v1308 = vmax.f32 %v755, 0.0
        %v1309 = vmax.f32 %v757, 0.0
        %v1310 = vmax.f32 %v759, 0.0
        %v1311 = vmax.f32 %v763, 0.0
        %v1312 = vmax.f32 %v765, 0.0
        %v1313 = vmax.f32 %v767, 0.0
        %v1314 = vmax.f32 %v769, 0.0
        %v1315 = vmax.f32 %v773, 0.0
        %v1316 = vmax.f32 %v775, 0.0
        %v1317 = vmax.f32 %v777, 0.0
        %v1318 = vmax.f32 %v779, 0.0
        %v1319 = vmax.f32 %v783, 0.0
        %v1320 = vmax.f32 %v785, 0.0
        %v1321 = vmax.f32 %v787, 0.0
        %v1322 = vmax.f32 %v789, 0.0
        %v1323 = vmax.f32 %v793, 0.0
        %v1324 = vmax.f32 %v795, 0.0
        %v1325 = vmax.f32 %v797, 0.0
        %v1326 = vmax.f32 %v799, 0.0
        %v1327 = vmax.f32 %v803, 0.0
        %v1328 = vmax.f32 %v805, 0.0
        %v1329 = vmax.f32 %v807, 0.0
        %v1330 = vmax.f32 %v809, 0.0
        %v1331 = vmax.f32 %v813, 0.0
        %v1332 = vmax.f32 %v815, 0.0
        %v1333 = vmax.f32 %v817, 0.0
        %v1334 = vmax.f32 %v819, 0.0
        %v1335 = vmax.f32 %v823, 0.0
        %v1336 = vmax.f32 %v825, 0.0
        %v1337 = vmax.f32 %v827, 0.0
        %v1338 = vmax.f32 %v829, 0.0
        %v1339 = vmax.f32 %v833, 0.0
        %v1340 = vmax.f32 %v835, 0.0
        %v1341 = vmax.f32 %v837, 0.0
        %v1342 = vmax.f32 %v839, 0.0
        %v1343 = vmax.f32 %v843, 0.0
        %v1344 = vmax.f32 %v845, 0.0
        %v1345 = vmax.f32 %v847, 0.0
        %v1346 = vmax.f32 %v849, 0.0
        %v1347 = vmax.f32 %v853, 0.0
        %v1348 = vmax.f32 %v855, 0.0
        %v1349 = vmax.f32 %v857, 0.0
        %v1350 = vmax.f32 %v859, 0.0
        %v1351 = vmax.f32 %v863, 0.0
        %v1352 = vmax.f32 %v865, 0.0
        %v1353 = vmax.f32 %v867, 0.0
        %v1354 = vmax.f32 %v869, 0.0
        %v1355 = vmax.f32 %v873, 0.0
        %v1356 = vmax.f32 %v875, 0.0
        %v1357 = vmax.f32 %v877, 0.0
        %v1358 = vmax.f32 %v879, 0.0
        %v1359 = vmax.f32 %v883, 0.0
        %v1360 = vmax.f32 %v885, 0.0
        %v1361 = vmax.f32 %v887, 0.0
        %v1362 = vmax.f32 %v889, 0.0
        %v1363 = vmax.f32 %v893, 0.0
        %v1364 = vmax.f32 %v895, 0.0
        %v1365 = vmax.f32 %v897, 0.0
        %v1366 = vmax.f32 %v899, 0.0
        %v1367 = vmax.f32 %v903, 0.0
        %v1368 = vmax.f32 %v905, 0.0
        %v1369 = vmax.f32 %v907, 0.0
        %v1370 = vmax.f32 %v909, 0.0
        %v1371 = vmax.f32 %v913, 0.0
        %v1372 = vmax.f32 %v915, 0.0
        %v1373 = vmax.f32 %v917, 0.0
        %v1374 = vmax.f32 %v919, 0.0
        %v1375 = vmax.f32 %v923, 0.0
        %v1376 = vmax.f32 %v925, 0.0
        %v1377 = vmax.f32 %v927, 0.0
        %v1378 = vmax.f32 %v929, 0.0
        %v1379 = vmax.f32 %v933, 0.0
        %v1380 = vmax.f32 %v935, 0.0
        %v1381 = vmax.f32 %v937, 0.0
        %v1382 = vmax.f32 %v939, 0.0
        %v1383 = vmax.f32 %v943, 0.0
        %v1384 = vmax.f32 %v945, 0.0
        %v1385 = vmax.f32 %v947, 0.0
        %v1386 = vmax.f32 %v949, 0.0
        %v1387 = vmax.f32 %v953, 0.0
        %v1388 = vmax.f32 %v955, 0.0
        %v1389 = vmax.f32 %v957, 0.0
        %v1390 = vmax.f32 %v959, 0.0
        %v1391 = vmax.f32 %v963, 0.0
        %v1392 = vmax.f32 %v965, 0.0
        %v1393 = vmax.f32 %v967, 0.0
        %v1394 = vmax.f32 %v969, 0.0
        %v1395 = vmax.f32 %v973, 0.0
        %v1396 = vmax.f32 %v975, 0.0
        %v1397 = vmax.f32 %v977, 0.0
        %v1398 = vmax.f32 %v979, 0.0
        %v1399 = vmax.f32 %v983, 0.0
        %v1400 = vmax.f32 %v985, 0.0
        %v1401 = vmax.f32 %v987, 0.0
        %v1402 = vmax.f32 %v989, 0.0
        %v1403 = vmax.f32 %v993, 0.0
        %v1404 = vmax.f32 %v995, 0.0
        %v1405 = vmax.f32 %v997, 0.0
        %v1406 = vmax.f32 %v999, 0.0
        %v1407 = vmax.f32 %v1003, 0.0
        %v1408 = vmax.f32 %v1005, 0.0
        %v1409 = vmax.f32 %v1007, 0.0
        %v1410 = vmax.f32 %v1009, 0.0
        %v1411 = vmax.f32 %v1013, 0.0
        %v1412 = vmax.f32 %v1015, 0.0
        %v1413 = vmax.f32 %v1017, 0.0
        %v1414 = vmax.f32 %v1019, 0.0
        %v1415 = vmax.f32 %v1023, 0.0
        %v1416 = vmax.f32 %v1025, 0.0
        %v1417 = vmax.f32 %v1027, 0.0
        %v1418 = vmax.f32 %v1029, 0.0
        %v1419 = vmax.f32 %v1033, 0.0
        %v1420 = vmax.f32 %v1035, 0.0
        %v1421 = vmax.f32 %v1037, 0.0
        %v1422 = vmax.f32 %v1039, 0.0
        %v1423 = vmax.f32 %v1043, 0.0
        %v1424 = vmax.f32 %v1045, 0.0
        %v1425 = vmax.f32 %v1047, 0.0
        %v1426 = vmax.f32 %v1049, 0.0
        %v1427 = vmax.f32 %v1053, 0.0
        %v1428 = vmax.f32 %v1055, 0.0
        %v1429 = vmax.f32 %v1057, 0.0
        %v1430 = vmax.f32 %v1059, 0.0
        %v1431 = vmax.f32 %v1063, 0.0
        %v1432 = vmax.f32 %v1065, 0.0
        %v1433 = vmax.f32 %v1067, 0.0
        %v1434 = vmax.f32 %v1069, 0.0
        %v1435 = vmax.f32 %v1073, 0.0
        %v1436 = vmax.f32 %v1075, 0.0
        %v1437 = vmax.f32 %v1077, 0.0
        %v1438 = vmax.f32 %v1079, 0.0
        %v1439 = vmax.f32 %v1083, 0.0
        %v1440 = vmax.f32 %v1085, 0.0
        %v1441 = vmax.f32 %v1087, 0.0
        %v1442 = vmax.f32 %v1089, 0.0
        %v1443 = vmax.f32 %v1093, 0.0
        %v1444 = vmax.f32 %v1095, 0.0
        %v1445 = vmax.f32 %v1097, 0.0
        %v1446 = vmax.f32 %v1099, 0.0
        %v1447 = vmax.f32 %v1103, 0.0
        %v1448 = vmax.f32 %v1105, 0.0
        %v1449 = vmax.f32 %v1107, 0.0
        %v1450 = vmax.f32 %v1109, 0.0
        %v1451 = vmax.f32 %v1113, 0.0
        %v1452 = vmax.f32 %v1115, 0.0
        %v1453 = vmax.f32 %v1117, 0.0
        %v1454 = vmax.f32 %v1119, 0.0
        %v1455 = vmax.f32 %v1123, 0.0
        %v1456 = vmax.f32 %v1125, 0.0
        %v1457 = vmax.f32 %v1127, 0.0
        %v1458 = vmax.f32 %v1129, 0.0
        %v1459 = vmax.f32 %v1133, 0.0
        %v1460 = vmax.f32 %v1135, 0.0
        %v1461 = vmax.f32 %v1137, 0.0
        %v1462 = vmax.f32 %v1139, 0.0
        %v1463 = vmax.f32 %v1143, 0.0
        %v1464 = vmax.f32 %v1145, 0.0
        %v1465 = vmax.f32 %v1147, 0.0
        %v1466 = vmax.f32 %v1149, 0.0
        %v1467 = vmax.f32 %v1153, 0.0
        %v1468 = vmax.f32 %v1155, 0.0
        %v1469 = vmax.f32 %v1157, 0.0
        %v1470 = vmax.f32 %v1159, 0.0
        %v1471 = vmax.f32 %v1163, 0.0
        %v1472 = vmax.f32 %v1165, 0.0
        %v1473 = vmax.f32 %v1167, 0.0
        %v1474 = vmax.f32 %v1169, 0.0
        %v1475 = vmax.f32 %v1173, 0.0
        %v1476 = vmax.f32 %v1175, 0.0
        %v1477 = vmax.f32 %v1177, 0.0
        %v1478 = vmax.f32 %v1179, 0.0
        %v1479 = vmax.f32 %v1183, 0.0
        %v1480 = vmax.f32 %v1185, 0.0
        %v1481 = vmax.f32 %v1187, 0.0
        %v1482 = vmax.f32 %v1189, 0.0
        %v1483 = vmax.f32 %v1193, 0.0
        %v1484 = vmax.f32 %v1195, 0.0
        %v1485 = vmax.f32 %v1197, 0.0
        %v1486 = vmax.f32 %v1199, 0.0
        %v1487 = vmax.f32 %v1203, 0.0
        %v1488 = vmax.f32 %v1205, 0.0
        %v1489 = vmax.f32 %v1207, 0.0
        %v1490 = vmax.f32 %v1209, 0.0
        %v1491 = vmax.f32 %v1213, 0.0
        %v1492 = vmax.f32 %v1215, 0.0
        %v1493 = vmax.f32 %v1217, 0.0
        %v1494 = vmax.f32 %v1219, 0.0
        %v1495 = vmax.f32 %v1223, 0.0
        %v1496 = vmax.f32 %v1225, 0.0
        %v1497 = vmax.f32 %v1227, 0.0
        %v1498 = vmax.f32 %v1229, 0.0
        %v1499 = vmax.f32 %v1233, 0.0
        %v1500 = vmax.f32 %v1235, 0.0
        %v1501 = vmax.f32 %v1237, 0.0
        %v1502 = vmax.f32 %v1239, 0.0
        %v1503 = vmax.f32 %v1243, 0.0
        %v1504 = vmax.f32 %v1245, 0.0
        %v1505 = vmax.f32 %v1247, 0.0
        %v1506 = vmax.f32 %v1249, 0.0
        %v1507 = vld [vmem:[%s215] sm:$0xff]
        %v1508 = vld [vmem:[%s215 + $0x8] sm:$0xff]
        %v1509 = vadd.f32 %v1251, %v1253
        %v1510 = vadd.f32 %v1509, %v1255
        %v1511 = vadd.f32 %v1510, %v1257
        %v1512 = vadd.f32 %v1511, %v1259
        %v1513 = vadd.f32 %v1512, %v1261
        %v1514 = vadd.f32 %v1513, %v1263
        %v1515 = vadd.f32 %v1514, %v1265
        %v1516 = vadd.f32 %v1515, %v1267
        %v1517 = vadd.f32 %v1516, %v1269
        %v1518 = vadd.f32 %v1517, %v1271
        %v1519 = vadd.f32 %v1518, %v1273
        %v1520 = vadd.f32 %v1519, %v1275
        %v1521 = vadd.f32 %v1520, %v1277
        %v1522 = vadd.f32 %v1521, %v1279
        %v1523 = vadd.f32 %v1522, %v1281
        %v1524 = vrot.slane %v1523, 4
        %v1525 = vadd.f32 %v1523, %v1524
        %v1526 = vrot.slane %v1525, 2
        %v1527 = vadd.f32 %v1525, %v1526
        %v1528 = vrot.slane %v1527, 1
        %v1529 = vadd.f32 %v1527, %v1528
        %v1530 = vadd.f32 %v1252, %v1254
        %v1531 = vadd.f32 %v1530, %v1256
        %v1532 = vadd.f32 %v1531, %v1258
        %v1533 = vadd.f32 %v1532, %v1260
        %v1534 = vadd.f32 %v1533, %v1262
        %v1535 = vadd.f32 %v1534, %v1264
        %v1536 = vadd.f32 %v1535, %v1266
        %v1537 = vadd.f32 %v1536, %v1268
        %v1538 = vadd.f32 %v1537, %v1270
        %v1539 = vadd.f32 %v1538, %v1272
        %v1540 = vadd.f32 %v1539, %v1274
        %v1541 = vadd.f32 %v1540, %v1276
        %v1542 = vadd.f32 %v1541, %v1278
        %v1543 = vadd.f32 %v1542, %v1280
        %v1544 = vadd.f32 %v1543, %v1282
        %v1545 = vrot.slane %v1544, 4
        %v1546 = vadd.f32 %v1544, %v1545
        %v1547 = vrot.slane %v1546, 2
        %v1548 = vadd.f32 %v1546, %v1547
        %v1549 = vrot.slane %v1548, 1
        %v1550 = vadd.f32 %v1548, %v1549
        %v1551 = vadd.f32 %v1283, %v1285
        %v1552 = vadd.f32 %v1551, %v1287
        %v1553 = vadd.f32 %v1552, %v1289
        %v1554 = vadd.f32 %v1553, %v1291
        %v1555 = vadd.f32 %v1554, %v1293
        %v1556 = vadd.f32 %v1555, %v1295
        %v1557 = vadd.f32 %v1556, %v1297
        %v1558 = vadd.f32 %v1557, %v1299
        %v1559 = vadd.f32 %v1558, %v1301
        %v1560 = vadd.f32 %v1559, %v1303
        %v1561 = vadd.f32 %v1560, %v1305
        %v1562 = vadd.f32 %v1561, %v1307
        %v1563 = vadd.f32 %v1562, %v1309
        %v1564 = vadd.f32 %v1563, %v1311
        %v1565 = vadd.f32 %v1564, %v1313
        %v1566 = vrot.slane %v1565, 4
        %v1567 = vadd.f32 %v1565, %v1566
        %v1568 = vrot.slane %v1567, 2
        %v1569 = vadd.f32 %v1567, %v1568
        %v1570 = vrot.slane %v1569, 1
        %v1571 = vadd.f32 %v1569, %v1570
        %v1572 = vadd.f32 %v1284, %v1286
        %v1573 = vadd.f32 %v1572, %v1288
        %v1574 = vadd.f32 %v1573, %v1290
        %v1575 = vadd.f32 %v1574, %v1292
        %v1576 = vadd.f32 %v1575, %v1294
        %v1577 = vadd.f32 %v1576, %v1296
        %v1578 = vadd.f32 %v1577, %v1298
        %v1579 = vadd.f32 %v1578, %v1300
        %v1580 = vadd.f32 %v1579, %v1302
        %v1581 = vadd.f32 %v1580, %v1304
        %v1582 = vadd.f32 %v1581, %v1306
        %v1583 = vadd.f32 %v1582, %v1308
        %v1584 = vadd.f32 %v1583, %v1310
        %v1585 = vadd.f32 %v1584, %v1312
        %v1586 = vadd.f32 %v1585, %v1314
        %v1587 = vrot.slane %v1586, 4
        %v1588 = vadd.f32 %v1586, %v1587
        %v1589 = vrot.slane %v1588, 2
        %v1590 = vadd.f32 %v1588, %v1589
        %v1591 = vrot.slane %v1590, 1
        %v1592 = vadd.f32 %v1590, %v1591
        %v1593 = vadd.f32 %v1315, %v1317
        %v1594 = vadd.f32 %v1593, %v1319
        %v1595 = vadd.f32 %v1594, %v1321
        %v1596 = vadd.f32 %v1595, %v1323
        %v1597 = vadd.f32 %v1596, %v1325
        %v1598 = vadd.f32 %v1597, %v1327
        %v1599 = vadd.f32 %v1598, %v1329
        %v1600 = vadd.f32 %v1599, %v1331
        %v1601 = vadd.f32 %v1600, %v1333
        %v1602 = vadd.f32 %v1601, %v1335
        %v1603 = vadd.f32 %v1602, %v1337
        %v1604 = vadd.f32 %v1603, %v1339
        %v1605 = vadd.f32 %v1604, %v1341
        %v1606 = vadd.f32 %v1605, %v1343
        %v1607 = vadd.f32 %v1606, %v1345
        %v1608 = vrot.slane %v1607, 4
        %v1609 = vadd.f32 %v1607, %v1608
        %v1610 = vrot.slane %v1609, 2
        %v1611 = vadd.f32 %v1609, %v1610
        %v1612 = vrot.slane %v1611, 1
        %v1613 = vadd.f32 %v1611, %v1612
        %v1614 = vadd.f32 %v1316, %v1318
        %v1615 = vadd.f32 %v1614, %v1320
        %v1616 = vadd.f32 %v1615, %v1322
        %v1617 = vadd.f32 %v1616, %v1324
        %v1618 = vadd.f32 %v1617, %v1326
        %v1619 = vadd.f32 %v1618, %v1328
        %v1620 = vadd.f32 %v1619, %v1330
        %v1621 = vadd.f32 %v1620, %v1332
        %v1622 = vadd.f32 %v1621, %v1334
        %v1623 = vadd.f32 %v1622, %v1336
        %v1624 = vadd.f32 %v1623, %v1338
        %v1625 = vadd.f32 %v1624, %v1340
        %v1626 = vadd.f32 %v1625, %v1342
        %v1627 = vadd.f32 %v1626, %v1344
        %v1628 = vadd.f32 %v1627, %v1346
        %v1629 = vrot.slane %v1628, 4
        %v1630 = vadd.f32 %v1628, %v1629
        %v1631 = vrot.slane %v1630, 2
        %v1632 = vadd.f32 %v1630, %v1631
        %v1633 = vrot.slane %v1632, 1
        %v1634 = vadd.f32 %v1632, %v1633
        %v1635 = vadd.f32 %v1347, %v1349
        %v1636 = vadd.f32 %v1635, %v1351
        %v1637 = vadd.f32 %v1636, %v1353
        %v1638 = vadd.f32 %v1637, %v1355
        %v1639 = vadd.f32 %v1638, %v1357
        %v1640 = vadd.f32 %v1639, %v1359
        %v1641 = vadd.f32 %v1640, %v1361
        %v1642 = vadd.f32 %v1641, %v1363
        %v1643 = vadd.f32 %v1642, %v1365
        %v1644 = vadd.f32 %v1643, %v1367
        %v1645 = vadd.f32 %v1644, %v1369
        %v1646 = vadd.f32 %v1645, %v1371
        %v1647 = vadd.f32 %v1646, %v1373
        %v1648 = vadd.f32 %v1647, %v1375
        %v1649 = vadd.f32 %v1648, %v1377
        %v1650 = vrot.slane %v1649, 4
        %v1651 = vadd.f32 %v1649, %v1650
        %v1652 = vrot.slane %v1651, 2
        %v1653 = vadd.f32 %v1651, %v1652
        %v1654 = vrot.slane %v1653, 1
        %v1655 = vadd.f32 %v1653, %v1654
        %v1656 = vadd.f32 %v1348, %v1350
        %v1657 = vadd.f32 %v1656, %v1352
        %v1658 = vadd.f32 %v1657, %v1354
        %v1659 = vadd.f32 %v1658, %v1356
        %v1660 = vadd.f32 %v1659, %v1358
        %v1661 = vadd.f32 %v1660, %v1360
        %v1662 = vadd.f32 %v1661, %v1362
        %v1663 = vadd.f32 %v1662, %v1364
        %v1664 = vadd.f32 %v1663, %v1366
        %v1665 = vadd.f32 %v1664, %v1368
        %v1666 = vadd.f32 %v1665, %v1370
        %v1667 = vadd.f32 %v1666, %v1372
        %v1668 = vadd.f32 %v1667, %v1374
        %v1669 = vadd.f32 %v1668, %v1376
        %v1670 = vadd.f32 %v1669, %v1378
        %v1671 = vrot.slane %v1670, 4
        %v1672 = vadd.f32 %v1670, %v1671
        %v1673 = vrot.slane %v1672, 2
        %v1674 = vadd.f32 %v1672, %v1673
        %v1675 = vrot.slane %v1674, 1
        %v1676 = vadd.f32 %v1674, %v1675
        %v1677 = vadd.f32 %v1379, %v1381
        %v1678 = vadd.f32 %v1677, %v1383
        %v1679 = vadd.f32 %v1678, %v1385
        %v1680 = vadd.f32 %v1679, %v1387
        %v1681 = vadd.f32 %v1680, %v1389
        %v1682 = vadd.f32 %v1681, %v1391
        %v1683 = vadd.f32 %v1682, %v1393
        %v1684 = vadd.f32 %v1683, %v1395
        %v1685 = vadd.f32 %v1684, %v1397
        %v1686 = vadd.f32 %v1685, %v1399
        %v1687 = vadd.f32 %v1686, %v1401
        %v1688 = vadd.f32 %v1687, %v1403
        %v1689 = vadd.f32 %v1688, %v1405
        %v1690 = vadd.f32 %v1689, %v1407
        %v1691 = vadd.f32 %v1690, %v1409
        %v1692 = vrot.slane %v1691, 4
        %v1693 = vadd.f32 %v1691, %v1692
        %v1694 = vrot.slane %v1693, 2
        %v1695 = vadd.f32 %v1693, %v1694
        %v1696 = vrot.slane %v1695, 1
        %v1697 = vadd.f32 %v1695, %v1696
        %v1698 = vadd.f32 %v1380, %v1382
        %v1699 = vadd.f32 %v1698, %v1384
        %v1700 = vadd.f32 %v1699, %v1386
        %v1701 = vadd.f32 %v1700, %v1388
        %v1702 = vadd.f32 %v1701, %v1390
        %v1703 = vadd.f32 %v1702, %v1392
        %v1704 = vadd.f32 %v1703, %v1394
        %v1705 = vadd.f32 %v1704, %v1396
        %v1706 = vadd.f32 %v1705, %v1398
        %v1707 = vadd.f32 %v1706, %v1400
        %v1708 = vadd.f32 %v1707, %v1402
        %v1709 = vadd.f32 %v1708, %v1404
        %v1710 = vadd.f32 %v1709, %v1406
        %v1711 = vadd.f32 %v1710, %v1408
        %v1712 = vadd.f32 %v1711, %v1410
        %v1713 = vrot.slane %v1712, 4
        %v1714 = vadd.f32 %v1712, %v1713
        %v1715 = vrot.slane %v1714, 2
        %v1716 = vadd.f32 %v1714, %v1715
        %v1717 = vrot.slane %v1716, 1
        %v1718 = vadd.f32 %v1716, %v1717
        %v1719 = vadd.f32 %v1411, %v1413
        %v1720 = vadd.f32 %v1719, %v1415
        %v1721 = vadd.f32 %v1720, %v1417
        %v1722 = vadd.f32 %v1721, %v1419
        %v1723 = vadd.f32 %v1722, %v1421
        %v1724 = vadd.f32 %v1723, %v1423
        %v1725 = vadd.f32 %v1724, %v1425
        %v1726 = vadd.f32 %v1725, %v1427
        %v1727 = vadd.f32 %v1726, %v1429
        %v1728 = vadd.f32 %v1727, %v1431
        %v1729 = vadd.f32 %v1728, %v1433
        %v1730 = vadd.f32 %v1729, %v1435
        %v1731 = vadd.f32 %v1730, %v1437
        %v1732 = vadd.f32 %v1731, %v1439
        %v1733 = vadd.f32 %v1732, %v1441
        %v1734 = vrot.slane %v1733, 4
        %v1735 = vadd.f32 %v1733, %v1734
        %v1736 = vrot.slane %v1735, 2
        %v1737 = vadd.f32 %v1735, %v1736
        %v1738 = vrot.slane %v1737, 1
        %v1739 = vadd.f32 %v1737, %v1738
        %v1740 = vadd.f32 %v1412, %v1414
        %v1741 = vadd.f32 %v1740, %v1416
        %v1742 = vadd.f32 %v1741, %v1418
        %v1743 = vadd.f32 %v1742, %v1420
        %v1744 = vadd.f32 %v1743, %v1422
        %v1745 = vadd.f32 %v1744, %v1424
        %v1746 = vadd.f32 %v1745, %v1426
        %v1747 = vadd.f32 %v1746, %v1428
        %v1748 = vadd.f32 %v1747, %v1430
        %v1749 = vadd.f32 %v1748, %v1432
        %v1750 = vadd.f32 %v1749, %v1434
        %v1751 = vadd.f32 %v1750, %v1436
        %v1752 = vadd.f32 %v1751, %v1438
        %v1753 = vadd.f32 %v1752, %v1440
        %v1754 = vadd.f32 %v1753, %v1442
        %v1755 = vrot.slane %v1754, 4
        %v1756 = vadd.f32 %v1754, %v1755
        %v1757 = vrot.slane %v1756, 2
        %v1758 = vadd.f32 %v1756, %v1757
        %v1759 = vrot.slane %v1758, 1
        %v1760 = vadd.f32 %v1758, %v1759
        %v1761 = vadd.f32 %v1443, %v1445
        %v1762 = vadd.f32 %v1761, %v1447
        %v1763 = vadd.f32 %v1762, %v1449
        %v1764 = vadd.f32 %v1763, %v1451
        %v1765 = vadd.f32 %v1764, %v1453
        %v1766 = vadd.f32 %v1765, %v1455
        %v1767 = vadd.f32 %v1766, %v1457
        %v1768 = vadd.f32 %v1767, %v1459
        %v1769 = vadd.f32 %v1768, %v1461
        %v1770 = vadd.f32 %v1769, %v1463
        %v1771 = vadd.f32 %v1770, %v1465
        %v1772 = vadd.f32 %v1771, %v1467
        %v1773 = vadd.f32 %v1772, %v1469
        %v1774 = vadd.f32 %v1773, %v1471
        %v1775 = vadd.f32 %v1774, %v1473
        %v1776 = vrot.slane %v1775, 4
        %v1777 = vadd.f32 %v1775, %v1776
        %v1778 = vrot.slane %v1777, 2
        %v1779 = vadd.f32 %v1777, %v1778
        %v1780 = vrot.slane %v1779, 1
        %v1781 = vadd.f32 %v1779, %v1780
        %v1782 = vadd.f32 %v1444, %v1446
        %v1783 = vadd.f32 %v1782, %v1448
        %v1784 = vadd.f32 %v1783, %v1450
        %v1785 = vadd.f32 %v1784, %v1452
        %v1786 = vadd.f32 %v1785, %v1454
        %v1787 = vadd.f32 %v1786, %v1456
        %v1788 = vadd.f32 %v1787, %v1458
        %v1789 = vadd.f32 %v1788, %v1460
        %v1790 = vadd.f32 %v1789, %v1462
        %v1791 = vadd.f32 %v1790, %v1464
        %v1792 = vadd.f32 %v1791, %v1466
        %v1793 = vadd.f32 %v1792, %v1468
        %v1794 = vadd.f32 %v1793, %v1470
        %v1795 = vadd.f32 %v1794, %v1472
        %v1796 = vadd.f32 %v1795, %v1474
        %v1797 = vrot.slane %v1796, 4
        %v1798 = vadd.f32 %v1796, %v1797
        %v1799 = vrot.slane %v1798, 2
        %v1800 = vadd.f32 %v1798, %v1799
        %v1801 = vrot.slane %v1800, 1
        %v1802 = vadd.f32 %v1800, %v1801
        %v1803 = vadd.f32 %v1475, %v1477
        %v1804 = vadd.f32 %v1803, %v1479
        %v1805 = vadd.f32 %v1804, %v1481
        %v1806 = vadd.f32 %v1805, %v1483
        %v1807 = vadd.f32 %v1806, %v1485
        %v1808 = vadd.f32 %v1807, %v1487
        %v1809 = vadd.f32 %v1808, %v1489
        %v1810 = vadd.f32 %v1809, %v1491
        %v1811 = vadd.f32 %v1810, %v1493
        %v1812 = vadd.f32 %v1811, %v1495
        %v1813 = vadd.f32 %v1812, %v1497
        %v1814 = vadd.f32 %v1813, %v1499
        %v1815 = vadd.f32 %v1814, %v1501
        %v1816 = vadd.f32 %v1815, %v1503
        %v1817 = vadd.f32 %v1816, %v1505
        %v1818 = vrot.slane %v1817, 4
        %v1819 = vadd.f32 %v1817, %v1818
        %v1820 = vrot.slane %v1819, 2
        %v1821 = vadd.f32 %v1819, %v1820
        %v1822 = vrot.slane %v1821, 1
        %v1823 = vadd.f32 %v1821, %v1822
        %v1824 = vadd.f32 %v1476, %v1478
        %v1825 = vadd.f32 %v1824, %v1480
        %v1826 = vadd.f32 %v1825, %v1482
        %v1827 = vadd.f32 %v1826, %v1484
        %v1828 = vadd.f32 %v1827, %v1486
        %v1829 = vadd.f32 %v1828, %v1488
        %v1830 = vadd.f32 %v1829, %v1490
        %v1831 = vadd.f32 %v1830, %v1492
        %v1832 = vadd.f32 %v1831, %v1494
        %v1833 = vadd.f32 %v1832, %v1496
        %v1834 = vadd.f32 %v1833, %v1498
        %v1835 = vadd.f32 %v1834, %v1500
        %v1836 = vadd.f32 %v1835, %v1502
        %v1837 = vadd.f32 %v1836, %v1504
        %v1838 = vadd.f32 %v1837, %v1506
        %v1839 = vrot.slane %v1838, 4
        %v1840 = vadd.f32 %v1838, %v1839
        %v1841 = vrot.slane %v1840, 2
        %v1842 = vadd.f32 %v1840, %v1841
        %v1843 = vrot.slane %v1842, 1
        %v1844 = vadd.f32 %v1842, %v1843
        %vm1861 = vcmask 1041409
        %v1862 = vsel %vm1861, %v1571, %v1529
        %vm1863 = vcmask 1042434
        %v1864 = vsel %vm1863, %v1613, %v1862
        %vm1865 = vcmask 1043459
        %v1866 = vsel %vm1865, %v1655, %v1864
        %vm1867 = vcmask 1044484
        %v1868 = vsel %vm1867, %v1697, %v1866
        %vm1869 = vcmask 1045509
        %v1870 = vsel %vm1869, %v1739, %v1868
        %vm1871 = vcmask 1046534
        %v1872 = vsel %vm1871, %v1781, %v1870
        %vm1873 = vcmask 1047559
        %v1874 = vsel %vm1873, %v1823, %v1872
        %v1875 = vsel %vm1861, %v1592, %v1550
        %v1876 = vsel %vm1863, %v1634, %v1875
        %v1877 = vsel %vm1865, %v1676, %v1876
        %v1878 = vsel %vm1867, %v1718, %v1877
        %v1879 = vsel %vm1869, %v1760, %v1878
        %v1880 = vsel %vm1871, %v1802, %v1879
        %v1881 = vsel %vm1873, %v1844, %v1880
        %v1884 = vadd.f32 %v1507, %v1874
        %v1885 = vadd.f32 %v1508, %v1881
        %1886 = vst [vmem:[%s215] sm:$0xff] %v1884
        %1887 = vst [vmem:[%s215 + $0x8] sm:$0xff] %v1885
        %s1888 = sand.u32 %s111, 1
        %s1889 = scalar_lea.sflag [#allocation4], %s1888
        %s1890 = sand.u32 %s111, 1
        %s1891 = smul.addr %s1890, 16
        %s1892 = scalar_lea.vmem [#allocation7], %s1891
        // Predicated region
        $region45: #{tpu_custom_call.1} parent=31 // pred_check
          %p1893 = pneg %p121
        $region46: #{tpu_custom_call.1} parent=31 // pred_check_branch
          %1895 = sbr.rel (%p1893) target = $region48
        $region47: #{tpu_custom_call.1} parent=31 // pred_region
          %s1897 = ssub.s32 256, 256
          %1898 = vsyncadd %s1889, %s1897
          %s1899 = smul.addr %s25, 2
          %s1900 = smul.addr %s1899, 128
          %s1901 = scalar_lea.hbm %s3, %s1900
          %s1903 = sshll.u32 %s1892, 4
          %s1904 = int_to_ptr.vmem [resolvable:$true] %s1903
          %1906 = dma.vmem_to_hbm [thread:$0]  %s1904, 256, %s1901, %s1889
        $region48: #{tpu_custom_call.1} parent=31 // pred_fallthru
          _
      $region32: #{tpu_custom_call.1} parent=5 // pred_fallthru
        _
      %p1907 = scmp.le.s32.totalorder 2, %s16
      // Predicated region
      $region49: #{tpu_custom_call.1} parent=5 // pred_check
        %p1908 = pneg %p1907
      $region50: #{tpu_custom_call.1} parent=5 // pred_check_branch
        %1910 = sbr.rel (%p1908) target = $region52
      $region51: #{tpu_custom_call.1} parent=5 // pred_region
        %s1911 = ssub.s32 %s16, 2
        // Predicated region
        $region53: #{tpu_custom_call.1} parent=51 // pred_check
          %p1912 = pneg %p127
        $region54: #{tpu_custom_call.1} parent=51 // pred_check_branch
          %1914 = sbr.rel (%p1912) target = $region56
        $region55: #{tpu_custom_call.1} parent=51 // pred_region
          %s1915 = sand.u32 %s112, 1
          %s1916 = scalar_lea.sflag [#allocation4], %s1915
          %s1917 = sand.u32 %s112, 1
          %s1918 = smul.addr %s1917, 16
          %s1919 = scalar_lea.vmem [#allocation7], %s1918
          %1920 = dma.done %s1916, 256
        $region56: #{tpu_custom_call.1} parent=51 // pred_fallthru
          _
      $region52: #{tpu_custom_call.1} parent=5 // pred_fallthru
        _
    $region6: #{tpu_custom_call.1} parent=1 // loop_footer
      %s20 = sadd.s32 1, %s16
    $region7: #{tpu_custom_call.1} parent=1 // loop_footer_branch
      %15 = sbr.rel target = $region3
    $region8: #{tpu_custom_call.1} parent=1 // loop_exit
      _
    %1921 = vsyncpa [#allocation3], 1
    %s1922 = scalar_lea.sflag [#allocation3], 1
    %1923 = vsyncpa %s1922, 1
    %1924 = vsyncpa [#allocation6], 1
    %1925 = vsyncpa [#allocation4], 1
    %s1926 = scalar_lea.sflag [#allocation4], 1
    %1927 = vsyncpa %s1926, 1

</llo_original>
